<compile_context>
chip_gen: v6e
topology: v6e:2x2x1
jax: 0.10.0
libtpu: 0.0.40
codegen_flags: <defaults>
</compile_context>

<pallas_src>
import jax
import jax.numpy as jnp
from jax import lax
from jax.experimental import pallas as pl
from jax.experimental.pallas import tpu as pltpu

LEAKY_SLOPE = 0.01  # matches nn.LeakyReLU default


def _leaky(x):
    return jnp.where(x > 0, x, LEAKY_SLOPE * x)


# ----------------------- kernel 1: fused GCMC encoder layer -----------------

def _make_enc_layer_kernel(num_users):
    def kernel(a_ref, h_ref, w_ref, o_ref, acc_ref):
        r = pl.program_id(0)

        @pl.when(r == 0)
        def _init():
            acc_ref[...] = jnp.zeros_like(acc_ref)

        a_f32 = a_ref[0]                                   # (U, I) adjacency, edge type r
        a = a_f32.astype(jnp.bfloat16)
        a_t = a_f32.T.astype(jnp.bfloat16)                 # on-chip transpose (XLU), no HBM copy
        h = h_ref[...].astype(jnp.bfloat16)                # (U+I, d_in) stacked [users; items]
        w = w_ref[0].astype(jnp.bfloat16)                  # (d_in, H) edge-type r transform

        # shared feature transform for BOTH towers in a single MXU pass
        t = jnp.dot(h, w, preferred_element_type=jnp.float32).astype(jnp.bfloat16)
        tu = t[:num_users]                                 # (U, H)
        ti = t[num_users:]                                 # (I, H)

        # graph propagation (users <- items, items <- users), f32 accumulation
        mu = jnp.dot(a, ti, preferred_element_type=jnp.float32)     # (U, H)
        mi = jnp.dot(a_t, tu, preferred_element_type=jnp.float32)   # (I, H)

        acc_ref[:num_users, :] += mu                       # agg='sum' over edge types
        acc_ref[num_users:, :] += mi

        @pl.when(r == pl.num_programs(0) - 1)
        def _fin():                                        # leaky epilogue, single store
            o_ref[...] = _leaky(acc_ref[...])

    return kernel


def enc_layer(adj, h_stack, w_stack, *, num_users):
    """One GCMC encoder layer (both towers). adj:(R,U,I)  h:(U+I,d)  w:(R,d,H)."""
    R, U, NI = adj.shape
    N, d_in = h_stack.shape
    H = w_stack.shape[-1]
    return pl.pallas_call(
        _make_enc_layer_kernel(num_users),
        out_shape=jax.ShapeDtypeStruct((N, H), jnp.float32),
        grid=(R,),
        in_specs=[
            pl.BlockSpec((1, U, NI), lambda r: (r, 0, 0)),   # adjacency slab per edge type
            pl.BlockSpec((N, d_in), lambda r: (0, 0)),       # stacked features (resident)
            pl.BlockSpec((1, d_in, H), lambda r: (r, 0, 0)),  # per-edge-type weights
        ],
        out_specs=pl.BlockSpec((N, H), lambda r: (0, 0)),
        scratch_shapes=[pltpu.VMEM((N, H), jnp.float32)],
        compiler_params=pltpu.CompilerParams(
            dimension_semantics=("arbitrary",)),             # edge-type axis is a reduction
    )(adj, h_stack, w_stack)


# ------------- kernel 2: dense head + decoder + rating prediction -----------

def _make_block_tail_kernel(num_users, n_layers_de):
    def kernel(*refs):
        h_ref, wd_ref, bd_ref = refs[0:3]
        dec_refs = refs[3:3 + 2 * n_layers_de]
        (wu_ref, wi_ref, u_idx_ref, i_idx_ref,
         hrec_ref, pred_ref) = refs[3 + 2 * n_layers_de:]

        # ---- GCMC dense head (weights shared across towers) + leaky ----------
        h = h_ref[...].astype(jnp.bfloat16)
        henc = _leaky(jnp.dot(h, wd_ref[...].astype(jnp.bfloat16),
                              preferred_element_type=jnp.float32) + bd_ref[...])

        # ---- decoder: reconstruct the input embeddings ------------------------
        cur = henc
        for l in range(n_layers_de):
            w = dec_refs[2 * l][...].astype(jnp.bfloat16)
            b = dec_refs[2 * l + 1][...]
            cur = jnp.dot(cur.astype(jnp.bfloat16), w,
                          preferred_element_type=jnp.float32) + b
            if l < n_layers_de - 1:
                cur = _leaky(cur)
        hrec_ref[...] = cur                                   # (U+I, in_feats)

        # ---- rating prediction (per-edge dot of projected embeddings) ---------
        henc_bf = henc.astype(jnp.bfloat16)
        uproj = jnp.dot(henc_bf[:num_users], wu_ref[...].astype(jnp.bfloat16),
                        preferred_element_type=jnp.float32)   # (U, r_hidden)
        iproj = jnp.dot(henc_bf[num_users:], wi_ref[...].astype(jnp.bfloat16),
                        preferred_element_type=jnp.float32)   # (I, r_hidden)

        # edge gather as one-hot selection matmuls built in-kernel (VPU + MXU),
        # replacing host-side jnp.take + a separate edge-dot kernel.
        num_items = hrec_ref.shape[0] - num_users
        E = u_idx_ref.shape[0]
        su = (u_idx_ref[...] ==
              lax.broadcasted_iota(jnp.int32, (E, num_users), 1)).astype(jnp.float32)
        si = (i_idx_ref[...] ==
              lax.broadcasted_iota(jnp.int32, (E, num_items), 1)).astype(jnp.float32)
        ue = jnp.dot(su, uproj, preferred_element_type=jnp.float32)   # (E, r_hidden)
        ie = jnp.dot(si, iproj, preferred_element_type=jnp.float32)
        pred_ref[...] = jnp.sum(ue * ie, axis=-1, keepdims=True)      # (E, 1)

    return kernel


def block_tail(h_stack, wd, bd, dec_ws, dec_bs, rp_wu, rp_wi, dec_u, dec_i,
               *, num_users):
    N, _ = h_stack.shape
    in_f = dec_ws[-1].shape[1] if dec_ws else wd.shape[1]
    E = dec_u.shape[0]
    n_layers_de = len(dec_ws)

    inputs = [h_stack.astype(jnp.float32), wd, bd.reshape(1, -1)]
    for w, b in zip(dec_ws, dec_bs):
        inputs += [w, b.reshape(1, -1)]
    inputs += [rp_wu, rp_wi,
               dec_u.reshape(E, 1).astype(jnp.int32),
               dec_i.reshape(E, 1).astype(jnp.int32)]

    def fullspec(x):
        rank = len(x.shape)
        return pl.BlockSpec(x.shape, lambda i, _r=rank: (0,) * _r)

    hrec, pred = pl.pallas_call(
        _make_block_tail_kernel(num_users, n_layers_de),
        out_shape=(jax.ShapeDtypeStruct((N, in_f), jnp.float32),
                   jax.ShapeDtypeStruct((E, 1), jnp.float32)),
        grid=(1,),
        in_specs=[fullspec(x) for x in inputs],
        out_specs=(pl.BlockSpec((N, in_f), lambda i: (0, 0)),
                   pl.BlockSpec((E, 1), lambda i: (0, 0))),
    )(*inputs)
    return hrec, pred[:, 0]                                  # .squeeze(1)


# ------------------------------ parameters ----------------------------------

def init_params(key, *, n_blocks, recurrent, n_layers_en, n_layers_de,
                edge_types, in_feats_dim, en_hidden_feats_dim,
                r_hidden_feats_dim, out_feats_dim):
    def dense(k, shape, scale=0.1):
        return (scale * jax.random.normal(k, shape)).astype(jnp.float32)

    n_real_blocks = 1 if recurrent else n_blocks
    n_keys = n_real_blocks * (n_layers_en + 1 + n_layers_de) + 2
    it = iter(jax.random.split(key, n_keys))

    blocks = []
    for _ in range(n_real_blocks):
        enc_W = []
        d_in = in_feats_dim
        for _l in range(n_layers_en):
            enc_W.append(dense(next(it), (edge_types, d_in, en_hidden_feats_dim)))
            d_in = en_hidden_feats_dim
        enc_dense_W = dense(next(it), (en_hidden_feats_dim, out_feats_dim))
        enc_dense_b = jnp.zeros((out_feats_dim,), jnp.float32)
        dec_W, dec_b = [], []
        d = out_feats_dim
        for _l in range(n_layers_de):
            dec_W.append(dense(next(it), (d, in_feats_dim)))
            dec_b.append(jnp.zeros((in_feats_dim,), jnp.float32))
            d = in_feats_dim
        blocks.append(dict(enc_W=enc_W, enc_dense_W=enc_dense_W,
                           enc_dense_b=enc_dense_b, dec_W=dec_W, dec_b=dec_b))

    rating = dict(rp_Wu=dense(next(it), (out_feats_dim, r_hidden_feats_dim)),
                  rp_Wi=dense(next(it), (out_feats_dim, r_hidden_feats_dim)))
    return dict(blocks=blocks, rating=rating)


# ------------------------------ forward pass --------------------------------

def _star_block_apply(bp, rating_p, adj, h_stack, dec_u, dec_i, cfg):
    """Encoder (fused GCMC layers) + dense/decoder/rating tail (one launch)."""
    h = h_stack
    for l in range(cfg["n_layers_en"]):
        h = enc_layer(adj, h, bp["enc_W"][l], num_users=cfg["num_users"])
    hrec, pred = block_tail(h, bp["enc_dense_W"], bp["enc_dense_b"],
                            bp["dec_W"], bp["dec_b"],
                            rating_p["rp_Wu"], rating_p["rp_Wi"],
                            dec_u, dec_i, num_users=cfg["num_users"])
    U = cfg["num_users"]
    # TODO(synk): ufreeze/ifreeze embedding-masking path not exercised (None in eval).
    return pred, hrec[:U], hrec[U:]


def build_forward(cfg):
    n_blocks = cfg["n_blocks"]
    recurrent = cfg["recurrent"]

    # NOTE: on v7x the user/item towers (or distinct blocks when recurrent=False)
    # could additionally be split across the two TensorCores with a "parallel"
    # grid axis; at these toy sizes a single fused launch per stage is fastest.
    @jax.jit
    def fwd(params, enc_adj, dec_u, dec_i, ufeats, ifeats):
        h0 = jnp.concatenate([ufeats, ifeats], axis=0)    # stack towers once (glue)
        all_ratings, all_recon = [], []
        cached = None
        for i in range(n_blocks):
            bp = params["blocks"][0] if recurrent else params["blocks"][i]
            if recurrent and cached is not None:
                # eval-mode: same weights + same unchanged inputs => identical
                # outputs per the reference forward; reuse instead of recompute.
                pred, ur, ir = cached
            else:
                pred, ur, ir = _star_block_apply(bp, params["rating"], enc_adj,
                                                 h0, dec_u, dec_i, cfg)
                if recurrent:
                    cached = (pred, ur, ir)
            all_ratings.append(pred)
            all_recon.append((ur, ir))
        return all_ratings, all_recon

    return fwd


# ---------------------------------- main -------------------------------------

if __name__ == "__main__":
    key = jax.random.PRNGKey(0)
    k_adj, k_uf, k_if, k_eu, k_ei, k_par = jax.random.split(key, 6)

    # small, lane-friendly shapes
    NUM_USERS, NUM_ITEMS = 16, 16
    EDGE_TYPES = 2
    IN_FEATS = 64
    EN_HIDDEN = 128
    R_HIDDEN = 64
    OUT_FEATS = 64
    N_BLOCKS = 2
    N_LAYERS_EN = 1
    N_LAYERS_DE = 2
    NUM_DEC_EDGES = 24

    # dense, GCMC-symmetrically-normalized bipartite adjacency per edge type
    raw = (jax.random.uniform(k_adj, (EDGE_TYPES, NUM_USERS, NUM_ITEMS)) < 0.3
           ).astype(jnp.float32)
    deg_u = jnp.clip(raw.sum(axis=2, keepdims=True), 1.0)
    deg_i = jnp.clip(raw.sum(axis=1, keepdims=True), 1.0)
    enc_adj = raw / jnp.sqrt(deg_u * deg_i)

    ufeats = jax.random.normal(k_uf, (NUM_USERS, IN_FEATS), jnp.float32)
    ifeats = jax.random.normal(k_if, (NUM_ITEMS, IN_FEATS), jnp.float32)

    # dec_graph as edge-endpoint index lists
    dec_u = jax.random.randint(k_eu, (NUM_DEC_EDGES,), 0, NUM_USERS, jnp.int32)
    dec_i = jax.random.randint(k_ei, (NUM_DEC_EDGES,), 0, NUM_ITEMS, jnp.int32)

    params = init_params(
        k_par, n_blocks=N_BLOCKS, recurrent=True,
        n_layers_en=N_LAYERS_EN, n_layers_de=N_LAYERS_DE,
        edge_types=EDGE_TYPES, in_feats_dim=IN_FEATS,
        en_hidden_feats_dim=EN_HIDDEN, r_hidden_feats_dim=R_HIDDEN,
        out_feats_dim=OUT_FEATS)

    cfg = dict(n_blocks=N_BLOCKS, recurrent=True, n_layers_en=N_LAYERS_EN,
               n_layers_de=N_LAYERS_DE, num_users=NUM_USERS)
    forward = build_forward(cfg)

    all_ratings, all_recon = forward(params, enc_adj, dec_u, dec_i, ufeats, ifeats)
    jax.block_until_ready(all_ratings)
    jax.block_until_ready(all_recon)

    assert len(all_ratings) == N_BLOCKS and len(all_recon) == N_BLOCKS
    assert all_ratings[0].shape == (NUM_DEC_EDGES,)
    assert all_recon[0][0].shape == (NUM_USERS, IN_FEATS)
    assert all_recon[0][1].shape == (NUM_ITEMS, IN_FEATS)
    assert bool(jnp.all(jnp.isfinite(all_ratings[0])))
    assert bool(jnp.all(jnp.isfinite(all_recon[0][0])))

    print("KERNEL_OK")
</pallas_src>

<mosaic_0001>
module attributes {stable_mosaic.version = 11 : i64} {
  func.func @kernel(%arg0: i32, %arg1: memref<1x16x16xf32, #tpu.memory_space<vmem>>, %arg2: memref<32x64xf32, #tpu.memory_space<vmem>>, %arg3: memref<1x64x128xf32, #tpu.memory_space<vmem>>, %arg4: memref<32x128xf32, #tpu.memory_space<vmem>>, %arg5: memref<32x128xf32, #tpu.memory_space<vmem>>) attributes {dimension_semantics = [#tpu.dimension_semantics<arbitrary>], iteration_bounds = array<i64: 2>, scalar_prefetch = 0 : i64, scratch_operands = 1 : i64, tpu.core_type = #tpu.core_type<tc>, window_params = [{transform_indices = @transform_0, window_bounds = array<i64: 1, 16, 16>}, {pipeline_mode = #tpu.pipeline_mode<synchronous>, transform_indices = @transform_1, window_bounds = array<i64: 32, 64>}, {transform_indices = @transform_2, window_bounds = array<i64: 1, 64, 128>}, {pipeline_mode = #tpu.pipeline_mode<synchronous>, transform_indices = @transform_3, window_bounds = array<i64: 32, 128>}]} {
    %c0_i32 = arith.constant 0 : i32
    %0 = arith.cmpi eq, %arg0, %c0_i32 : i32
    %1 = arith.extui %0 : i1 to i32
    %c0_i32_0 = arith.constant 0 : i32
    %2 = arith.cmpi ne, %1, %c0_i32_0 : i32
    scf.if %2 {
      %cst_18 = arith.constant 0.000000e+00 : f32
      %28 = vector.broadcast %cst_18 : f32 to vector<32x128xf32>
      %c0_19 = arith.constant 0 : index
      %c0_20 = arith.constant 0 : index
      %29 = vector.load %arg5[%c0_19, %c0_20] : memref<32x128xf32, #tpu.memory_space<vmem>>, vector<32x128xf32>
      tpu.vector_store %arg5[%c0_19, %c0_20], %28 {strides = array<i32>} : memref<32x128xf32, #tpu.memory_space<vmem>>, vector<32x128xf32>,
    } else {
    }
    %c0 = arith.constant 0 : index
    %c0_1 = arith.constant 0 : index
    %c0_2 = arith.constant 0 : index
    %3 = vector.load %arg1[%c0, %c0_1, %c0_2] : memref<1x16x16xf32, #tpu.memory_space<vmem>>, vector<1x16x16xf32>
    %4 = vector.shape_cast %3 : vector<1x16x16xf32> to vector<16x16xf32>
    %5 = arith.truncf %4 : vector<16x16xf32> to vector<16x16xbf16>
    %6 = tpu.transpose %4, [1, 0] : vector<16x16xf32> -> vector<16x16xf32>
    %7 = arith.truncf %6 : vector<16x16xf32> to vector<16x16xbf16>
    %c0_3 = arith.constant 0 : index
    %c0_4 = arith.constant 0 : index
    %8 = vector.load %arg2[%c0_3, %c0_4] : memref<32x64xf32, #tpu.memory_space<vmem>>, vector<32x64xf32>
    %9 = arith.truncf %8 : vector<32x64xf32> to vector<32x64xbf16>
    %c0_5 = arith.constant 0 : index
    %c0_6 = arith.constant 0 : index
    %c0_7 = arith.constant 0 : index
    %10 = vector.load %arg3[%c0_5, %c0_6, %c0_7] : memref<1x64x128xf32, #tpu.memory_space<vmem>>, vector<1x64x128xf32>
    %11 = vector.shape_cast %10 : vector<1x64x128xf32> to vector<64x128xf32>
    %12 = arith.truncf %11 : vector<64x128xf32> to vector<64x128xbf16>
    %cst = arith.constant dense<0.000000e+00> : vector<32x128xf32>
    %13 = tpu.matmul %9, %12, %cst {dimension_numbers = #tpu.dot_dimension_numbers<[1], [0], [0], [1], [0, 0, 1, 1], [], []>} : vector<32x64xbf16>, vector<64x128xbf16>, vector<32x128xf32> -> vector<32x128xf32>
    %14 = arith.truncf %13 : vector<32x128xf32> to vector<32x128xbf16>
    %15 = vector.extract_strided_slice %14 {offsets = [0, 0], sizes = [16, 128], strides = [1, 1]} : vector<32x128xbf16> to vector<16x128xbf16>
    %16 = vector.extract_strided_slice %14 {offsets = [16, 0], sizes = [16, 128], strides = [1, 1]} : vector<32x128xbf16> to vector<16x128xbf16>
    %cst_8 = arith.constant dense<0.000000e+00> : vector<16x128xf32>
    %17 = tpu.matmul %5, %16, %cst_8 {dimension_numbers = #tpu.dot_dimension_numbers<[1], [0], [0], [1], [0, 0, 1, 1], [], []>} : vector<16x16xbf16>, vector<16x128xbf16>, vector<16x128xf32> -> vector<16x128xf32>
    %cst_9 = arith.constant dense<0.000000e+00> : vector<16x128xf32>
    %18 = tpu.matmul %7, %15, %cst_9 {dimension_numbers = #tpu.dot_dimension_numbers<[1], [0], [0], [1], [0, 0, 1, 1], [], []>} : vector<16x16xbf16>, vector<16x128xbf16>, vector<16x128xf32> -> vector<16x128xf32>
    %c0_10 = arith.constant 0 : index
    %c0_11 = arith.constant 0 : index
    %19 = vector.load %arg5[%c0_10, %c0_11] : memref<32x128xf32, #tpu.memory_space<vmem>>, vector<16x128xf32>
    %20 = arith.addf %19, %17 : vector<16x128xf32>
    %c0_12 = arith.constant 0 : index
    %c0_13 = arith.constant 0 : index
    %21 = vector.load %arg5[%c0_12, %c0_13] : memref<32x128xf32, #tpu.memory_space<vmem>>, vector<16x128xf32>
    tpu.vector_store %arg5[%c0_12, %c0_13], %20 {strides = array<i32>} : memref<32x128xf32, #tpu.memory_space<vmem>>, vector<16x128xf32>,
    %c16 = arith.constant 16 : index
    %c0_14 = arith.constant 0 : index
    %22 = vector.load %arg5[%c16, %c0_14] : memref<32x128xf32, #tpu.memory_space<vmem>>, vector<16x128xf32>
    %23 = arith.addf %22, %18 : vector<16x128xf32>
    %c16_15 = arith.constant 16 : index
    %c0_16 = arith.constant 0 : index
    %24 = vector.load %arg5[%c16_15, %c0_16] : memref<32x128xf32, #tpu.memory_space<vmem>>, vector<16x128xf32>
    tpu.vector_store %arg5[%c16_15, %c0_16], %23 {strides = array<i32>} : memref<32x128xf32, #tpu.memory_space<vmem>>, vector<16x128xf32>,
    %c1_i32 = arith.constant 1 : i32
    %25 = arith.cmpi eq, %arg0, %c1_i32 : i32
    %26 = arith.extui %25 : i1 to i32
    %c0_i32_17 = arith.constant 0 : i32
    %27 = arith.cmpi ne, %26, %c0_i32_17 : i32
    scf.if %27 {
      %c0_18 = arith.constant 0 : index
      %c0_19 = arith.constant 0 : index
      %28 = vector.load %arg5[%c0_18, %c0_19] : memref<32x128xf32, #tpu.memory_space<vmem>>, vector<32x128xf32>
      %cst_20 = arith.constant 0.000000e+00 : f32
      %29 = vector.broadcast %cst_20 : f32 to vector<32x128xf32>
      %30 = arith.cmpf ogt, %28, %29 : vector<32x128xf32>
      %cst_21 = arith.constant 0.00999999977 : f32
      %31 = vector.broadcast %cst_21 : f32 to vector<32x128xf32>
      %32 = arith.mulf %31, %28 : vector<32x128xf32>
      %33 = arith.select %30, %28, %32 : vector<32x128xi1>, vector<32x128xf32>
      %c0_22 = arith.constant 0 : index
      %c0_23 = arith.constant 0 : index
      %34 = vector.load %arg4[%c0_22, %c0_23] : memref<32x128xf32, #tpu.memory_space<vmem>>, vector<32x128xf32>
      tpu.vector_store %arg4[%c0_22, %c0_23], %33 {strides = array<i32>} : memref<32x128xf32, #tpu.memory_space<vmem>>, vector<32x128xf32>,
    } else {
    }
    return
  }
  func.func @transform_0(%arg0: i32) -> (i32, i32, i32) {
    %c0_i32 = arith.constant 0 : i32
    %c0_i32_0 = arith.constant 0 : i32
    %c0_i32_1 = arith.constant 0 : i32
    return %arg0, %c0_i32, %c0_i32_0 : i32, i32, i32
  }
  func.func @transform_1(%arg0: i32) -> (i32, i32) {
    %c0_i32 = arith.constant 0 : i32
    %c0_i32_0 = arith.constant 0 : i32
    %c0_i32_1 = arith.constant 0 : i32
    return %c0_i32, %c0_i32_0 : i32, i32
  }
  func.func @transform_2(%arg0: i32) -> (i32, i32, i32) {
    %c0_i32 = arith.constant 0 : i32
    %c0_i32_0 = arith.constant 0 : i32
    %c0_i32_1 = arith.constant 0 : i32
    return %arg0, %c0_i32, %c0_i32_0 : i32, i32, i32
  }
  func.func @transform_3(%arg0: i32) -> (i32, i32) {
    %c0_i32 = arith.constant 0 : i32
    %c0_i32_0 = arith.constant 0 : i32
    %c0_i32_1 = arith.constant 0 : i32
    return %c0_i32, %c0_i32_0 : i32, i32
  }
}

module attributes {stable_mosaic.version = 11 : i64} {
  func.func @kernel(%arg0: i32, %arg1: memref<32x128xf32, #tpu.memory_space<vmem>>, %arg2: memref<128x64xf32, #tpu.memory_space<vmem>>, %arg3: memref<1x64xf32, #tpu.memory_space<vmem>>, %arg4: memref<64x64xf32, #tpu.memory_space<vmem>>, %arg5: memref<1x64xf32, #tpu.memory_space<vmem>>, %arg6: memref<64x64xf32, #tpu.memory_space<vmem>>, %arg7: memref<1x64xf32, #tpu.memory_space<vmem>>, %arg8: memref<64x64xf32, #tpu.memory_space<vmem>>, %arg9: memref<64x64xf32, #tpu.memory_space<vmem>>, %arg10: memref<24x1xi32, #tpu.memory_space<vmem>>, %arg11: memref<24x1xi32, #tpu.memory_space<vmem>>, %arg12: memref<32x64xf32, #tpu.memory_space<vmem>>, %arg13: memref<24x1xf32, #tpu.memory_space<vmem>>) attributes {dimension_semantics = [#tpu.dimension_semantics<arbitrary>], iteration_bounds = array<i64: 1>, scalar_prefetch = 0 : i64, scratch_operands = 0 : i64, tpu.core_type = #tpu.core_type<tc>, window_params = [{pipeline_mode = #tpu.pipeline_mode<synchronous>, transform_indices = @transform_0, window_bounds = array<i64: 32, 128>}, {pipeline_mode = #tpu.pipeline_mode<synchronous>, transform_indices = @transform_1, window_bounds = array<i64: 128, 64>}, {pipeline_mode = #tpu.pipeline_mode<synchronous>, transform_indices = @transform_2, window_bounds = array<i64: 1, 64>}, {pipeline_mode = #tpu.pipeline_mode<synchronous>, transform_indices = @transform_3, window_bounds = array<i64: 64, 64>}, {pipeline_mode = #tpu.pipeline_mode<synchronous>, transform_indices = @transform_4, window_bounds = array<i64: 1, 64>}, {pipeline_mode = #tpu.pipeline_mode<synchronous>, transform_indices = @transform_5, window_bounds = array<i64: 64, 64>}, {pipeline_mode = #tpu.pipeline_mode<synchronous>, transform_indices = @transform_6, window_bounds = array<i64: 1, 64>}, {pipeline_mode = #tpu.pipeline_mode<synchronous>, transform_indices = @transform_7, window_bounds = array<i64: 64, 64>}, {pipeline_mode = #tpu.pipeline_mode<synchronous>, transform_indices = @transform_8, window_bounds = array<i64: 64, 64>}, {pipeline_mode = #tpu.pipeline_mode<synchronous>, transform_indices = @transform_9, window_bounds = array<i64: 24, 1>}, {pipeline_mode = #tpu.pipeline_mode<synchronous>, transform_indices = @transform_10, window_bounds = array<i64: 24, 1>}, {pipeline_mode = #tpu.pipeline_mode<synchronous>, transform_indices = @transform_11, window_bounds = array<i64: 32, 64>}, {pipeline_mode = #tpu.pipeline_mode<synchronous>, transform_indices = @transform_12, window_bounds = array<i64: 24, 1>}]} {
    %c0 = arith.constant 0 : index
    %c0_0 = arith.constant 0 : index
    %0 = vector.load %arg1[%c0, %c0_0] : memref<32x128xf32, #tpu.memory_space<vmem>>, vector<32x128xf32>
    %1 = arith.truncf %0 : vector<32x128xf32> to vector<32x128xbf16>
    %c0_1 = arith.constant 0 : index
    %c0_2 = arith.constant 0 : index
    %2 = vector.load %arg2[%c0_1, %c0_2] : memref<128x64xf32, #tpu.memory_space<vmem>>, vector<128x64xf32>
    %3 = arith.truncf %2 : vector<128x64xf32> to vector<128x64xbf16>
    %cst = arith.constant dense<0.000000e+00> : vector<32x64xf32>
    %4 = tpu.matmul %1, %3, %cst {dimension_numbers = #tpu.dot_dimension_numbers<[1], [0], [0], [1], [0, 0, 1, 1], [], []>} : vector<32x128xbf16>, vector<128x64xbf16>, vector<32x64xf32> -> vector<32x64xf32>
    %c0_3 = arith.constant 0 : index
    %c0_4 = arith.constant 0 : index
    %5 = vector.load %arg3[%c0_3, %c0_4] : memref<1x64xf32, #tpu.memory_space<vmem>>, vector<1x64xf32>
    %6 = vector.broadcast %5 : vector<1x64xf32> to vector<32x64xf32>
    %7 = arith.addf %4, %6 : vector<32x64xf32>
    %cst_5 = arith.constant 0.000000e+00 : f32
    %8 = vector.broadcast %cst_5 : f32 to vector<32x64xf32>
    %9 = arith.cmpf ogt, %7, %8 : vector<32x64xf32>
    %cst_6 = arith.constant 0.00999999977 : f32
    %10 = vector.broadcast %cst_6 : f32 to vector<32x64xf32>
    %11 = arith.mulf %10, %7 : vector<32x64xf32>
    %12 = arith.select %9, %7, %11 : vector<32x64xi1>, vector<32x64xf32>
    %c0_7 = arith.constant 0 : index
    %c0_8 = arith.constant 0 : index
    %13 = vector.load %arg4[%c0_7, %c0_8] : memref<64x64xf32, #tpu.memory_space<vmem>>, vector<64x64xf32>
    %14 = arith.truncf %13 : vector<64x64xf32> to vector<64x64xbf16>
    %c0_9 = arith.constant 0 : index
    %c0_10 = arith.constant 0 : index
    %15 = vector.load %arg5[%c0_9, %c0_10] : memref<1x64xf32, #tpu.memory_space<vmem>>, vector<1x64xf32>
    %16 = arith.truncf %12 : vector<32x64xf32> to vector<32x64xbf16>
    %cst_11 = arith.constant dense<0.000000e+00> : vector<32x64xf32>
    %17 = tpu.matmul %16, %14, %cst_11 {dimension_numbers = #tpu.dot_dimension_numbers<[1], [0], [0], [1], [0, 0, 1, 1], [], []>} : vector<32x64xbf16>, vector<64x64xbf16>, vector<32x64xf32> -> vector<32x64xf32>
    %18 = vector.broadcast %15 : vector<1x64xf32> to vector<32x64xf32>
    %19 = arith.addf %17, %18 : vector<32x64xf32>
    %cst_12 = arith.constant 0.000000e+00 : f32
    %20 = vector.broadcast %cst_12 : f32 to vector<32x64xf32>
    %21 = arith.cmpf ogt, %19, %20 : vector<32x64xf32>
    %cst_13 = arith.constant 0.00999999977 : f32
    %22 = vector.broadcast %cst_13 : f32 to vector<32x64xf32>
    %23 = arith.mulf %22, %19 : vector<32x64xf32>
    %24 = arith.select %21, %19, %23 : vector<32x64xi1>, vector<32x64xf32>
    %c0_14 = arith.constant 0 : index
    %c0_15 = arith.constant 0 : index
    %25 = vector.load %arg6[%c0_14, %c0_15] : memref<64x64xf32, #tpu.memory_space<vmem>>, vector<64x64xf32>
    %26 = arith.truncf %25 : vector<64x64xf32> to vector<64x64xbf16>
    %c0_16 = arith.constant 0 : index
    %c0_17 = arith.constant 0 : index
    %27 = vector.load %arg7[%c0_16, %c0_17] : memref<1x64xf32, #tpu.memory_space<vmem>>, vector<1x64xf32>
    %28 = arith.truncf %24 : vector<32x64xf32> to vector<32x64xbf16>
    %cst_18 = arith.constant dense<0.000000e+00> : vector<32x64xf32>
    %29 = tpu.matmul %28, %26, %cst_18 {dimension_numbers = #tpu.dot_dimension_numbers<[1], [0], [0], [1], [0, 0, 1, 1], [], []>} : vector<32x64xbf16>, vector<64x64xbf16>, vector<32x64xf32> -> vector<32x64xf32>
    %30 = vector.broadcast %27 : vector<1x64xf32> to vector<32x64xf32>
    %31 = arith.addf %29, %30 : vector<32x64xf32>
    %c0_19 = arith.constant 0 : index
    %c0_20 = arith.constant 0 : index
    %32 = vector.load %arg12[%c0_19, %c0_20] : memref<32x64xf32, #tpu.memory_space<vmem>>, vector<32x64xf32>
    tpu.vector_store %arg12[%c0_19, %c0_20], %31 {strides = array<i32>} : memref<32x64xf32, #tpu.memory_space<vmem>>, vector<32x64xf32>,
    %33 = arith.truncf %12 : vector<32x64xf32> to vector<32x64xbf16>
    %34 = vector.extract_strided_slice %33 {offsets = [0, 0], sizes = [16, 64], strides = [1, 1]} : vector<32x64xbf16> to vector<16x64xbf16>
    %c0_21 = arith.constant 0 : index
    %c0_22 = arith.constant 0 : index
    %35 = vector.load %arg8[%c0_21, %c0_22] : memref<64x64xf32, #tpu.memory_space<vmem>>, vector<64x64xf32>
    %36 = arith.truncf %35 : vector<64x64xf32> to vector<64x64xbf16>
    %cst_23 = arith.constant dense<0.000000e+00> : vector<16x64xf32>
    %37 = tpu.matmul %34, %36, %cst_23 {dimension_numbers = #tpu.dot_dimension_numbers<[1], [0], [0], [1], [0, 0, 1, 1], [], []>} : vector<16x64xbf16>, vector<64x64xbf16>, vector<16x64xf32> -> vector<16x64xf32>
    %38 = vector.extract_strided_slice %33 {offsets = [16, 0], sizes = [16, 64], strides = [1, 1]} : vector<32x64xbf16> to vector<16x64xbf16>
    %c0_24 = arith.constant 0 : index
    %c0_25 = arith.constant 0 : index
    %39 = vector.load %arg9[%c0_24, %c0_25] : memref<64x64xf32, #tpu.memory_space<vmem>>, vector<64x64xf32>
    %40 = arith.truncf %39 : vector<64x64xf32> to vector<64x64xbf16>
    %cst_26 = arith.constant dense<0.000000e+00> : vector<16x64xf32>
    %41 = tpu.matmul %38, %40, %cst_26 {dimension_numbers = #tpu.dot_dimension_numbers<[1], [0], [0], [1], [0, 0, 1, 1], [], []>} : vector<16x64xbf16>, vector<64x64xbf16>, vector<16x64xf32> -> vector<16x64xf32>
    %c0_27 = arith.constant 0 : index
    %c0_28 = arith.constant 0 : index
    %42 = vector.load %arg10[%c0_27, %c0_28] : memref<24x1xi32, #tpu.memory_space<vmem>>, vector<24x1xi32>
    %43 = tpu.iota {dimensions = array<i32: 1>} : vector<24x16xi32>
    %44 = vector.broadcast %42 : vector<24x1xi32> to vector<24x16xi32>
    %45 = arith.cmpi eq, %44, %43 : vector<24x16xi32>
    %46 = arith.extui %45 : vector<24x16xi1> to vector<24x16xi32>
    %47 = arith.sitofp %46 : vector<24x16xi32> to vector<24x16xf32>
    %c0_29 = arith.constant 0 : index
    %c0_30 = arith.constant 0 : index
    %48 = vector.load %arg11[%c0_29, %c0_30] : memref<24x1xi32, #tpu.memory_space<vmem>>, vector<24x1xi32>
    %49 = tpu.iota {dimensions = array<i32: 1>} : vector<24x16xi32>
    %50 = vector.broadcast %48 : vector<24x1xi32> to vector<24x16xi32>
    %51 = arith.cmpi eq, %50, %49 : vector<24x16xi32>
    %52 = arith.extui %51 : vector<24x16xi1> to vector<24x16xi32>
    %53 = arith.sitofp %52 : vector<24x16xi32> to vector<24x16xf32>
    %cst_31 = arith.constant dense<0.000000e+00> : vector<24x64xf32>
    %54 = tpu.matmul %47, %37, %cst_31 {dimension_numbers = #tpu.dot_dimension_numbers<[1], [0], [0], [1], [0, 0, 1, 1], [], []>} : vector<24x16xf32>, vector<16x64xf32>, vector<24x64xf32> -> vector<24x64xf32>
    %cst_32 = arith.constant dense<0.000000e+00> : vector<24x64xf32>
    %55 = tpu.matmul %53, %41, %cst_32 {dimension_numbers = #tpu.dot_dimension_numbers<[1], [0], [0], [1], [0, 0, 1, 1], [], []>} : vector<24x16xf32>, vector<16x64xf32>, vector<24x64xf32> -> vector<24x64xf32>
    %56 = arith.mulf %54, %55 : vector<24x64xf32>
    %cst_33 = arith.constant dense<0.000000e+00> : vector<24xf32>
    %57 = vector.multi_reduction <add>, %56, %cst_33 [1] : vector<24x64xf32> to vector<24xf32>
    %58 = vector.shape_cast %57 : vector<24xf32> to vector<24x1xf32>
    %c0_34 = arith.constant 0 : index
    %c0_35 = arith.constant 0 : index
    %59 = vector.load %arg13[%c0_34, %c0_35] : memref<24x1xf32, #tpu.memory_space<vmem>>, vector<24x1xf32>
    tpu.vector_store %arg13[%c0_34, %c0_35], %58 {strides = array<i32>} : memref<24x1xf32, #tpu.memory_space<vmem>>, vector<24x1xf32>,
    return
  }
  func.func @transform_0(%arg0: i32) -> (i32, i32) {
    %c0_i32 = arith.constant 0 : i32
    %c0_i32_0 = arith.constant 0 : i32
    %c0_i32_1 = arith.constant 0 : i32
    return %c0_i32, %c0_i32_0 : i32, i32
  }
  func.func @transform_1(%arg0: i32) -> (i32, i32) {
    %c0_i32 = arith.constant 0 : i32
    %c0_i32_0 = arith.constant 0 : i32
    %c0_i32_1 = arith.constant 0 : i32
    return %c0_i32, %c0_i32_0 : i32, i32
  }
  func.func @transform_2(%arg0: i32) -> (i32, i32) {
    %c0_i32 = arith.constant 0 : i32
    %c0_i32_0 = arith.constant 0 : i32
    %c0_i32_1 = arith.constant 0 : i32
    return %c0_i32, %c0_i32_0 : i32, i32
  }
  func.func @transform_3(%arg0: i32) -> (i32, i32) {
    %c0_i32 = arith.constant 0 : i32
    %c0_i32_0 = arith.constant 0 : i32
    %c0_i32_1 = arith.constant 0 : i32
    return %c0_i32, %c0_i32_0 : i32, i32
  }
  func.func @transform_4(%arg0: i32) -> (i32, i32) {
    %c0_i32 = arith.constant 0 : i32
    %c0_i32_0 = arith.constant 0 : i32
    %c0_i32_1 = arith.constant 0 : i32
    return %c0_i32, %c0_i32_0 : i32, i32
  }
  func.func @transform_5(%arg0: i32) -> (i32, i32) {
    %c0_i32 = arith.constant 0 : i32
    %c0_i32_0 = arith.constant 0 : i32
    %c0_i32_1 = arith.constant 0 : i32
    return %c0_i32, %c0_i32_0 : i32, i32
  }
  func.func @transform_6(%arg0: i32) -> (i32, i32) {
    %c0_i32 = arith.constant 0 : i32
    %c0_i32_0 = arith.constant 0 : i32
    %c0_i32_1 = arith.constant 0 : i32
    return %c0_i32, %c0_i32_0 : i32, i32
  }
  func.func @transform_7(%arg0: i32) -> (i32, i32) {
    %c0_i32 = arith.constant 0 : i32
    %c0_i32_0 = arith.constant 0 : i32
    %c0_i32_1 = arith.constant 0 : i32
    return %c0_i32, %c0_i32_0 : i32, i32
  }
  func.func @transform_8(%arg0: i32) -> (i32, i32) {
    %c0_i32 = arith.constant 0 : i32
    %c0_i32_0 = arith.constant 0 : i32
    %c0_i32_1 = arith.constant 0 : i32
    return %c0_i32, %c0_i32_0 : i32, i32
  }
  func.func @transform_9(%arg0: i32) -> (i32, i32) {
    %c0_i32 = arith.constant 0 : i32
    %c0_i32_0 = arith.constant 0 : i32
    %c0_i32_1 = arith.constant 0 : i32
    return %c0_i32, %c0_i32_0 : i32, i32
  }
  func.func @transform_10(%arg0: i32) -> (i32, i32) {
    %c0_i32 = arith.constant 0 : i32
    %c0_i32_0 = arith.constant 0 : i32
    %c0_i32_1 = arith.constant 0 : i32
    return %c0_i32, %c0_i32_0 : i32, i32
  }
  func.func @transform_11(%arg0: i32) -> (i32, i32) {
    %c0_i32 = arith.constant 0 : i32
    %c0_i32_0 = arith.constant 0 : i32
    %c0_i32_1 = arith.constant 0 : i32
    return %c0_i32, %c0_i32_0 : i32, i32
  }
  func.func @transform_12(%arg0: i32) -> (i32, i32) {
    %c0_i32 = arith.constant 0 : i32
    %c0_i32_0 = arith.constant 0 : i32
    %c0_i32_1 = arith.constant 0 : i32
    return %c0_i32, %c0_i32_0 : i32, i32
  }
}

</mosaic_0001>

<llo_original>
// kernel: fwd.2
$region0: #{fwd.2}
  #allocation0 [shape = 'u32[]', space=smem, size = 0x4, offset = 0x4, fixed_abs, tag = 'smem constant byte address 0x4 - core index']
  #allocation1 [shape = 'u32[144,128]{1,0:T(1,128)}', space=vmem, size = 0x12000, scoped, tag = 'internal scratch']
  #allocation2 [shape = 'f32[32,128]{1,0:T(8,128)}', space=vmem, size = 0x4000, scoped, tag = 'scratch operand']
  %s0 = inlined_call_operand.hbm [shape: f32[2,16,16], index: 0, kind: input, shape index: {}]
  %s1 = inlined_call_operand.vmem [shape: f32[32,64], index: 1, kind: input, shape index: {}]
  %s2 = inlined_call_operand.vmem [shape: f32[2,64,128], index: 2, kind: input, shape index: {}]
  %s3 = inlined_call_operand.vmem [shape: f32[32,128], index: 3, kind: output, shape index: {}]
  %s4 = sld [smem:[#allocation0]]
  $region57: #{fwd.2} parent=0
    _
  %s6 = ssub.s32 1, %s4
  %s7 = scalar_select 0, %s6, %s4
  $region1: #{fwd.2} parent=0
    #allocation3 [shape = 'u8[16384]{0}', space=vmem, size = 0x4000, scoped, tag = 'input window, operand 0']
    #allocation4 [shape = 's32[2]{0}', space=sflag, size = 0x8, scoped, tag = 'scoped memory for fwd.2']
    %8 = vsyncpa [#allocation4], 0
    %s9 = scalar_lea.sflag [#allocation4], 1
    %10 = vsyncpa %s9, 0
    loop: start=0, step=1, limit=4
    $region2: #{fwd.2} parent=1 // loop_pre_header
      _
    $region3: #{fwd.2} parent=1 // loop_header
      %s12 = sphi 0, %s16
      %p13 = scmp.ge.s32.totalorder %s12, 4
      %s22 = sphi 0, %s24
      %s25 = sphi 0, %s22
      %s26 = sphi 0, %s25
      %s42 = sphi 0, %s26
      %s46 = sphi 0, %s46
      %s48 = sphi 0, %s46
      %s49 = sphi 0, %s48
      %s63 = sphi 0, %s49
      %s69 = sphi 0, %s71
      %s72 = sphi 0, %s69
      %s73 = sphi 0, %s72
      %s89 = sphi 0, %s73
      %s93 = sphi 0, %s93
      %s95 = sphi 0, %s93
      %s96 = sphi 0, %s95
      %s110 = sphi 0, %s96
    $region4: #{fwd.2} parent=1 // loop_header_branch
      %15 = sbr.rel (%p13) target = $region8
    $region5: #{fwd.2} parent=1 // loop_body
      %s17 = ssub.s32 %s12, 1
      %s18 = ssub.s32 %s12, 2
      %s19 = sadd.s32 %s12, 1
      %s20 = ssub.s32 %s12, %s19
      %p21 = scmp.eq.s32.totalorder %s20, 0
      %s23 = sadd.s32 %s22, 1
      %s24 = scalar_select %p21, %s22, %s23
      %p27 = pneg %p21
      %p28 = scmp.eq.s32.totalorder %s12, 1
      %p29 = por %p27, %p28
      %p30 = scmp.ne.s32.totalorder %s22, %s25
      %p31 = scmp.eq.s32.totalorder %s12, 0
      %p32 = por %p30, %p31
      %p33 = scmp.ne.s32.totalorder %s22, %s25
      %p34 = scmp.eq.s32.totalorder %s17, 1
      %p35 = por %p33, %p34
      %p36 = scmp.ne.s32.totalorder %s25, %s26
      %p37 = scmp.eq.s32.totalorder %s17, 0
      %p38 = por %p36, %p37
      %p39 = scmp.ne.s32.totalorder %s25, %s26
      %p40 = scmp.eq.s32.totalorder %s18, 1
      %p41 = por %p39, %p40
      %p43 = scmp.ne.s32.totalorder %s26, %s42
      %p44 = scmp.eq.s32.totalorder %s18, 0
      %p45 = por %p43, %p44
      %s47 = sadd.s32 %s46, 1
      %p50 = scmp.eq.s32.totalorder %s12, 1
      %p51 = scmp.ne.s32.totalorder %s46, %s48
      %p52 = scmp.eq.s32.totalorder %s12, 0
      %p53 = por %p51, %p52
      %p54 = scmp.ne.s32.totalorder %s46, %s48
      %p55 = scmp.eq.s32.totalorder %s17, 1
      %p56 = por %p54, %p55
      %p57 = scmp.ne.s32.totalorder %s48, %s49
      %p58 = scmp.eq.s32.totalorder %s17, 0
      %p59 = por %p57, %p58
      %p60 = scmp.ne.s32.totalorder %s48, %s49
      %p61 = scmp.eq.s32.totalorder %s18, 1
      %p62 = por %p60, %p61
      %p64 = scmp.ne.s32.totalorder %s49, %s63
      %p65 = scmp.eq.s32.totalorder %s18, 0
      %p66 = por %p64, %p65
      %s67 = ssub.s32 %s12, %s19
      %p68 = scmp.eq.s32.totalorder %s67, 0
      %s70 = sadd.s32 %s69, 1
      %s71 = scalar_select %p68, %s69, %s70
      %p74 = pneg %p68
      %p75 = scmp.eq.s32.totalorder %s12, 1
      %p76 = por %p74, %p75
      %p77 = scmp.ne.s32.totalorder %s69, %s72
      %p78 = scmp.eq.s32.totalorder %s12, 0
      %p79 = por %p77, %p78
      %p80 = scmp.ne.s32.totalorder %s69, %s72
      %p81 = scmp.eq.s32.totalorder %s17, 1
      %p82 = por %p80, %p81
      %p83 = scmp.ne.s32.totalorder %s72, %s73
      %p84 = scmp.eq.s32.totalorder %s17, 0
      %p85 = por %p83, %p84
      %p86 = scmp.ne.s32.totalorder %s72, %s73
      %p87 = scmp.eq.s32.totalorder %s18, 1
      %p88 = por %p86, %p87
      %p90 = scmp.ne.s32.totalorder %s73, %s89
      %p91 = scmp.eq.s32.totalorder %s18, 0
      %p92 = por %p90, %p91
      %s94 = sadd.s32 %s93, 1
      %p97 = scmp.eq.s32.totalorder %s12, 1
      %p98 = scmp.ne.s32.totalorder %s93, %s95
      %p99 = scmp.eq.s32.totalorder %s12, 0
      %p100 = por %p98, %p99
      %p101 = scmp.ne.s32.totalorder %s93, %s95
      %p102 = scmp.eq.s32.totalorder %s17, 1
      %p103 = por %p101, %p102
      %p104 = scmp.ne.s32.totalorder %s95, %s96
      %p105 = scmp.eq.s32.totalorder %s17, 0
      %p106 = por %p104, %p105
      %p107 = scmp.ne.s32.totalorder %s95, %s96
      %p108 = scmp.eq.s32.totalorder %s18, 1
      %p109 = por %p107, %p108
      %p111 = scmp.ne.s32.totalorder %s96, %s110
      %p112 = scmp.eq.s32.totalorder %s18, 0
      %p113 = por %p111, %p112
      %p114 = scmp.le.s32.totalorder 1, %s12
      %p115 = scmp.lt.s32.totalorder %s12, 3
      %p116 = pnand %p114, %p115
      %p117 = pneg %p116
      // Predicated region
      $region9: #{fwd.2} parent=5 // pred_check
        _
      $region10: #{fwd.2} parent=5 // pred_check_branch
        %119 = sbr.rel (%p116) target = $region12
      $region11: #{fwd.2} parent=5 // pred_region
        %s120 = ssub.s32 %s12, 1
        // Predicated region
        $region13: #{fwd.2} parent=11 // pred_check
          %p121 = pneg %p59
        $region14: #{fwd.2} parent=11 // pred_check_branch
          %123 = sbr.rel (%p121) target = $region16
        $region15: #{fwd.2} parent=11 // pred_region
          _
        $region16: #{fwd.2} parent=11 // pred_fallthru
          _
      $region12: #{fwd.2} parent=5 // pred_fallthru
        _
      %p124 = scmp.lt.s32.totalorder %s12, 2
      // Predicated region
      $region17: #{fwd.2} parent=5 // pred_check
        %p125 = pneg %p124
      $region18: #{fwd.2} parent=5 // pred_check_branch
        %127 = sbr.rel (%p125) target = $region20
      $region19: #{fwd.2} parent=5 // pred_region
        // Predicated region
        $region21: #{fwd.2} parent=19 // pred_check
          %p128 = pneg %p32
        $region22: #{fwd.2} parent=19 // pred_check_branch
          %130 = sbr.rel (%p128) target = $region24
        $region23: #{fwd.2} parent=19 // pred_region
          %s131 = sand.u32 %s22, 1
          %s132 = scalar_lea.sflag [#allocation4], %s131
          %s133 = sand.u32 %s22, 1
          %s134 = smul.addr %s133, 16
          %s135 = scalar_lea.vmem [#allocation3], %s134
          %s137 = ssub.s32 256, 256
          %138 = vsyncadd %s132, %s137
          %s139 = smul.addr %s12, 2
          %s140 = smul.addr %s139, 128
          %s141 = scalar_lea.hbm %s0, %s140
          %s142 = sshll.u32 %s135, 4
          %s143 = int_to_ptr.vmem [resolvable:$true] %s142
          %148 = dma.hbm_to_vmem [thread:$0]  %s141, 256, %s143, %s132, 128, 128, 8
        $region24: #{fwd.2} parent=19 // pred_fallthru
          _
        // Predicated region
        $region25: #{fwd.2} parent=19 // pred_check
          %p149 = pneg %p79
        $region26: #{fwd.2} parent=19 // pred_check_branch
          %151 = sbr.rel (%p149) target = $region28
        $region27: #{fwd.2} parent=19 // pred_region
          %p152 = scmp.lt.s32.totalorder %s12, 1
          %s153 = scalar_select %p152, %s12, 1
          %s154 = smul.addr %s153, 8
          %s155 = smul.addr %s154, 8
          %s156 = scalar_lea.vmem %s2, %s155
        $region28: #{fwd.2} parent=19 // pred_fallthru
          _
      $region20: #{fwd.2} parent=5 // pred_fallthru
        _
      %p157 = scmp.le.s32.totalorder 1, %s12
      %p158 = scmp.lt.s32.totalorder %s12, 3
      %p159 = pnand %p157, %p158
      %p160 = pneg %p159
      // Predicated region
      $region29: #{fwd.2} parent=5 // pred_check
        _
      $region30: #{fwd.2} parent=5 // pred_check_branch
        %162 = sbr.rel (%p159) target = $region32
      $region31: #{fwd.2} parent=5 // pred_region
        %s163 = ssub.s32 %s12, 1
        %s164 = sand.u32 %s25, 1
        %s165 = scalar_lea.sflag [#allocation4], %s164
        %s166 = sand.u32 %s25, 1
        %s167 = smul.addr %s166, 16
        %s168 = scalar_lea.vmem [#allocation3], %s167
        // Predicated region
        $region33: #{fwd.2} parent=31 // pred_check
          %p169 = pneg %p38
        $region34: #{fwd.2} parent=31 // pred_check_branch
          %171 = sbr.rel (%p169) target = $region36
        $region35: #{fwd.2} parent=31 // pred_region
          %172 = dma.done %s165, 256
        $region36: #{fwd.2} parent=31 // pred_fallthru
          _
        %s173 = sand.u32 %s25, 1
        %s174 = scalar_lea.sflag [#allocation4], %s173
        %s175 = sand.u32 %s25, 1
        %s176 = smul.addr %s175, 16
        %s177 = scalar_lea.vmem [#allocation3], %s176
        %p178 = pneg %p38
        %p179 = pneg %p35
        %p180 = pneg %p59
        %p181 = pneg %p56
        %p182 = scmp.lt.s32.totalorder %s17, 1
        %s183 = scalar_select %p182, %s17, 1
        %s184 = smul.addr %s183, 8
        %s185 = smul.addr %s184, 8
        %s186 = scalar_lea.vmem %s2, %s185
        %p187 = pneg %p85
        %p188 = pneg %p82
        %p189 = pneg %p106
        %p190 = pneg %p103
        %p191 = scmp.lt.s32.totalorder %s17, 1
        %s192 = scalar_select %p191, %s17, 1
        %s193 = smul.addr %s192, 8
        %s194 = smul.addr %s193, 8
        %s195 = scalar_lea.vmem %s2, %s194
        %p197 = scmp.eq.s32.totalorder %s17, 0
        // Predicated region
        $region37: #{fwd.2} parent=31 // pred_check
          %p198 = pneg %p197
        $region38: #{fwd.2} parent=31 // pred_check_branch
          %200 = sbr.rel (%p198) target = $region40
        $region39: #{fwd.2} parent=31 // pred_region
          %201 = vst [vmem:[#allocation2] sm:$0xff] 0.0
          %202 = vst [vmem:[#allocation2 + $0x8] sm:$0xff] 0.0
          %203 = vst [vmem:[#allocation2 + $0x10] sm:$0xff] 0.0
          %204 = vst [vmem:[#allocation2 + $0x18] sm:$0xff] 0.0
        $region40: #{fwd.2} parent=31 // pred_fallthru
          _
        %v205 = vld [vmem:[%s168] sm:$0xff]
        %v206 = vld [vmem:[%s168 + $0x8] sm:$0xff]
        %v207 = vpack.c.bf16 %v206, %v205
        %208 = vxpose.xlu0.b32.start [1/16] %v205, 128
        %209 = vxpose.xlu0.b32.cont [2/16] %v206, 128
        %210 = vxpose.xlu0.b32.cont [3/16] 0.0, 128
        %211 = vxpose.xlu0.b32.cont [4/16] 0.0, 128
        %212 = vxpose.xlu0.b32.cont [5/16] 0.0, 128
        %213 = vxpose.xlu0.b32.cont [6/16] 0.0, 128
        %214 = vxpose.xlu0.b32.cont [7/16] 0.0, 128
        %215 = vxpose.xlu0.b32.cont [8/16] 0.0, 128
        %216 = vxpose.xlu0.b32.cont [9/16] 0.0, 128
        %217 = vxpose.xlu0.b32.cont [10/16] 0.0, 128
        %218 = vxpose.xlu0.b32.cont [11/16] 0.0, 128
        %219 = vxpose.xlu0.b32.cont [12/16] 0.0, 128
        %220 = vxpose.xlu0.b32.cont [13/16] 0.0, 128
        %221 = vxpose.xlu0.b32.cont [14/16] 0.0, 128
        %222 = vxpose.xlu0.b32.cont [15/16] 0.0, 128
        %223 = vxpose.xlu0.b32.end [16/16] 0.0, 128
        %v224 = vpop.trf.xlu0
        %v225 = vpop.trf.xlu0
        %v226 = vpop.trf.xlu0
        %v227 = vpop.trf.xlu0
        %v228 = vpop.trf.xlu0
        %v229 = vpop.trf.xlu0
        %v230 = vpop.trf.xlu0
        %v231 = vpop.trf.xlu0
        %v232 = vpop.trf.xlu0
        %v233 = vpop.trf.xlu0
        %v234 = vpop.trf.xlu0
        %v235 = vpop.trf.xlu0
        %v236 = vpop.trf.xlu0
        %v237 = vpop.trf.xlu0
        %v238 = vpop.trf.xlu0
        %v239 = vpop.trf.xlu0
        %v240 = vpack.c.bf16 %v225, %v224
        %v241 = vld [vmem:[%s1] sm:$0xff]
        %v242 = vld [vmem:[%s1 + $0x8] sm:$0xff]
        %v243 = vld [vmem:[%s1 + $0x10] sm:$0xff]
        %v244 = vld [vmem:[%s1 + $0x18] sm:$0xff]
        %v245 = vpack.c.bf16 %v242, %v241
        %v246 = vpack.c.bf16 %v244, %v243
        %v247 = vld [vmem:[%s195] sm:$0xff]
        %v248 = vld [vmem:[%s195 + $0x8] sm:$0xff]
        %v249 = vld [vmem:[%s195 + $0x10] sm:$0xff]
        %v250 = vld [vmem:[%s195 + $0x18] sm:$0xff]
        %v251 = vld [vmem:[%s195 + $0x20] sm:$0xff]
        %v252 = vld [vmem:[%s195 + $0x28] sm:$0xff]
        %v253 = vld [vmem:[%s195 + $0x30] sm:$0xff]
        %v254 = vld [vmem:[%s195 + $0x38] sm:$0xff]
        %v255 = vpack.c.bf16 %v248, %v247
        %v256 = vpack.c.bf16 %v250, %v249
        %v257 = vpack.c.bf16 %v252, %v251
        %v258 = vpack.c.bf16 %v254, %v253
        %vm259 = vcmask 523264
        %v261 = vsel %vm259, %v245, 0
        %v264 = vsel %vm259, %v246, 0
        %266 = vmatprep.subr.bf16.mxu0 0
        %267 = vmatpush1.bf16.msra.mxu0 0
        %268 = vmatprep.subr.bf16.mxu0 0
        %269 = vmatpush1.bf16.msra.mxu0 0
        %270 = vmatprep.subr.bf16.mxu0 0
        %271 = vmatpush1.bf16.msra.mxu0 0
        %272 = vmatprep.subr.bf16.mxu0 0
        %273 = vmatpush1.bf16.msra.mxu0 0
        %274 = vmatprep.subr.bf16.mxu0 0
        %275 = vmatpush1.bf16.msra.mxu0 %v258
        %276 = vmatprep.subr.bf16.mxu0 0
        %277 = vmatpush1.bf16.msra.mxu0 %v257
        %278 = vmatprep.subr.bf16.mxu0 0
        %279 = vmatpush1.bf16.msra.mxu0 %v256
        %280 = vmatprep.subr.bf16.mxu0 0
        %281 = vmatpush1.bf16.msra.mxu0 %v255
        %282 = vmatprep.subr.bf16.mxu0 0
        %283 = vmatpush2.bf16.msra.mxu0 0
        %284 = vmatprep.subr.bf16.mxu0 0
        %285 = vmatpush2.bf16.msra.mxu0 0
        %286 = vmatprep.subr.bf16.mxu0 0
        %287 = vmatpush2.bf16.msra.mxu0 0
        %288 = vmatprep.subr.bf16.mxu0 0
        %289 = vmatpush2.bf16.msra.mxu0 0
        %290 = vmatprep.subr.bf16.mxu0 0
        %291 = vmatpush2.bf16.msra.mxu0 0
        %292 = vmatprep.subr.bf16.mxu0 0
        %293 = vmatpush2.bf16.msra.mxu0 0
        %294 = vmatprep.subr.bf16.mxu0 0
        %295 = vmatpush2.bf16.msra.mxu0 0
        %296 = vmatprep.subr.bf16.mxu0 0
        %297 = vmatpush2.bf16.msra.mxu0 0
        %298 = vmatprep.mubr.bf16.mxu0 0
        %299 = vmatmul.mubr.bf16.gmra.mxu0 %v261
        %v300 = vpop.f32.mrf.mxu0
        %v301 = vadd.f32 0.0, %v300
        %v302 = vpop.f32.mrf.mxu0
        %v303 = vpop.f32.mrf.mxu0
        %v304 = vadd.f32 0.0, %v303
        %v305 = vpop.f32.mrf.mxu0
        %306 = vmatprep.mubr.bf16.mxu0 0
        %307 = vmatmul.mubr.bf16.gmra.mxu0 %v264
        %v308 = vpop.f32.mrf.mxu0
        %v309 = vadd.f32 0.0, %v308
        %v310 = vpop.f32.mrf.mxu0
        %v311 = vpop.f32.mrf.mxu0
        %v312 = vadd.f32 0.0, %v311
        %v313 = vpop.f32.mrf.mxu0
        %314 = vdwg.mxu0
        %v315 = vpack.c.bf16 %v304, %v301
        %v316 = vpack.c.bf16 %v312, %v309
        %vm317 = vcmask 130048
        %v319 = vsel %vm317, %v207, 0
        %321 = vmatprep.subr.bf16.mxu0 0
        %322 = vmatpush1.bf16.msra.mxu0 0
        %323 = vmatprep.subr.bf16.mxu0 0
        %324 = vmatpush1.bf16.msra.mxu0 0
        %325 = vmatprep.subr.bf16.mxu0 0
        %326 = vmatpush1.bf16.msra.mxu0 0
        %327 = vmatprep.subr.bf16.mxu0 0
        %328 = vmatpush1.bf16.msra.mxu0 0
        %329 = vmatprep.subr.bf16.mxu0 0
        %330 = vmatpush1.bf16.msra.mxu0 0
        %331 = vmatprep.subr.bf16.mxu0 0
        %332 = vmatpush1.bf16.msra.mxu0 0
        %333 = vmatprep.subr.bf16.mxu0 0
        %334 = vmatpush1.bf16.msra.mxu0 0
        %335 = vmatprep.subr.bf16.mxu0 0
        %336 = vmatpush1.bf16.msra.mxu0 %v316
        %337 = vmatprep.subr.bf16.mxu0 0
        %338 = vmatpush2.bf16.msra.mxu0 0
        %339 = vmatprep.subr.bf16.mxu0 0
        %340 = vmatpush2.bf16.msra.mxu0 0
        %341 = vmatprep.subr.bf16.mxu0 0
        %342 = vmatpush2.bf16.msra.mxu0 0
        %343 = vmatprep.subr.bf16.mxu0 0
        %344 = vmatpush2.bf16.msra.mxu0 0
        %345 = vmatprep.subr.bf16.mxu0 0
        %346 = vmatpush2.bf16.msra.mxu0 0
        %347 = vmatprep.subr.bf16.mxu0 0
        %348 = vmatpush2.bf16.msra.mxu0 0
        %349 = vmatprep.subr.bf16.mxu0 0
        %350 = vmatpush2.bf16.msra.mxu0 0
        %351 = vmatprep.subr.bf16.mxu0 0
        %352 = vmatpush2.bf16.msra.mxu0 0
        %353 = vmatprep.mubr.bf16.mxu0 0
        %354 = vmatmul.mubr.bf16.gmra.mxu0 %v319
        %v355 = vpop.f32.mrf.mxu0
        %v356 = vadd.f32 0.0, %v355
        %v357 = vpop.f32.mrf.mxu0
        %v358 = vpop.f32.mrf.mxu0
        %v359 = vadd.f32 0.0, %v358
        %v360 = vpop.f32.mrf.mxu0
        %361 = vdwg.mxu0
        %v363 = vsel %vm317, %v240, 0
        %365 = vmatprep.subr.bf16.mxu0 0
        %366 = vmatpush1.bf16.msra.mxu0 0
        %367 = vmatprep.subr.bf16.mxu0 0
        %368 = vmatpush1.bf16.msra.mxu0 0
        %369 = vmatprep.subr.bf16.mxu0 0
        %370 = vmatpush1.bf16.msra.mxu0 0
        %371 = vmatprep.subr.bf16.mxu0 0
        %372 = vmatpush1.bf16.msra.mxu0 0
        %373 = vmatprep.subr.bf16.mxu0 0
        %374 = vmatpush1.bf16.msra.mxu0 0
        %375 = vmatprep.subr.bf16.mxu0 0
        %376 = vmatpush1.bf16.msra.mxu0 0
        %377 = vmatprep.subr.bf16.mxu0 0
        %378 = vmatpush1.bf16.msra.mxu0 0
        %379 = vmatprep.subr.bf16.mxu0 0
        %380 = vmatpush1.bf16.msra.mxu0 %v315
        %381 = vmatprep.subr.bf16.mxu0 0
        %382 = vmatpush2.bf16.msra.mxu0 0
        %383 = vmatprep.subr.bf16.mxu0 0
        %384 = vmatpush2.bf16.msra.mxu0 0
        %385 = vmatprep.subr.bf16.mxu0 0
        %386 = vmatpush2.bf16.msra.mxu0 0
        %387 = vmatprep.subr.bf16.mxu0 0
        %388 = vmatpush2.bf16.msra.mxu0 0
        %389 = vmatprep.subr.bf16.mxu0 0
        %390 = vmatpush2.bf16.msra.mxu0 0
        %391 = vmatprep.subr.bf16.mxu0 0
        %392 = vmatpush2.bf16.msra.mxu0 0
        %393 = vmatprep.subr.bf16.mxu0 0
        %394 = vmatpush2.bf16.msra.mxu0 0
        %395 = vmatprep.subr.bf16.mxu0 0
        %396 = vmatpush2.bf16.msra.mxu0 0
        %397 = vmatprep.mubr.bf16.mxu0 0
        %398 = vmatmul.mubr.bf16.gmra.mxu0 %v363
        %v399 = vpop.f32.mrf.mxu0
        %v400 = vadd.f32 0.0, %v399
        %v401 = vpop.f32.mrf.mxu0
        %v402 = vpop.f32.mrf.mxu0
        %v403 = vadd.f32 0.0, %v402
        %v404 = vpop.f32.mrf.mxu0
        %405 = vdwg.mxu0
        %v406 = vld [vmem:[#allocation2] sm:$0xff]
        %v407 = vld [vmem:[#allocation2 + $0x8] sm:$0xff]
        %v408 = vadd.f32 %v406, %v356
        %v409 = vadd.f32 %v407, %v359
        %410 = vst [vmem:[#allocation2] sm:$0xff] %v408
        %411 = vst [vmem:[#allocation2 + $0x8] sm:$0xff] %v409
        %v412 = vld [vmem:[#allocation2 + $0x10] sm:$0xff]
        %v413 = vld [vmem:[#allocation2 + $0x18] sm:$0xff]
        %v414 = vadd.f32 %v412, %v400
        %v415 = vadd.f32 %v413, %v403
        %416 = vst [vmem:[#allocation2 + $0x10] sm:$0xff] %v414
        %417 = vst [vmem:[#allocation2 + $0x18] sm:$0xff] %v415
        %p418 = scmp.eq.s32.totalorder %s17, 1
        // Predicated region
        $region41: #{fwd.2} parent=31 // pred_check
          %p419 = pneg %p418
        $region42: #{fwd.2} parent=31 // pred_check_branch
          %421 = sbr.rel (%p419) target = $region44
        $region43: #{fwd.2} parent=31 // pred_region
          %v422 = vld [vmem:[#allocation2] sm:$0xff]
          %v423 = vld [vmem:[#allocation2 + $0x8] sm:$0xff]
          %v424 = vld [vmem:[#allocation2 + $0x10] sm:$0xff]
          %v425 = vld [vmem:[#allocation2 + $0x18] sm:$0xff]
          %vm426 = vcmp.gt.f32.partialorder %v422, 0.0
          %vm427 = vcmp.gt.f32.partialorder %v423, 0.0
          %vm428 = vcmp.gt.f32.partialorder %v424, 0.0
          %vm429 = vcmp.gt.f32.partialorder %v425, 0.0
          %v430 = vmul.f32 %v422, 0.01
          %v431 = vmul.f32 %v423, 0.01
          %v432 = vmul.f32 %v424, 0.01
          %v433 = vmul.f32 %v425, 0.01
          %v434 = vsel %vm426, %v422, %v430
          %v435 = vsel %vm427, %v423, %v431
          %v436 = vsel %vm428, %v424, %v432
          %v437 = vsel %vm429, %v425, %v433
          %438 = vst [vmem:[%s3] sm:$0xff] %v434
          %439 = vst [vmem:[%s3 + $0x8] sm:$0xff] %v435
          %440 = vst [vmem:[%s3 + $0x10] sm:$0xff] %v436
          %441 = vst [vmem:[%s3 + $0x18] sm:$0xff] %v437
        $region44: #{fwd.2} parent=31 // pred_fallthru
          _
        // Predicated region
        $region45: #{fwd.2} parent=31 // pred_check
          %p442 = pneg %p103
        $region46: #{fwd.2} parent=31 // pred_check_branch
          %444 = sbr.rel (%p442) target = $region48
        $region47: #{fwd.2} parent=31 // pred_region
          _
        $region48: #{fwd.2} parent=31 // pred_fallthru
          _
        // Predicated region
        $region49: #{fwd.2} parent=31 // pred_check
          %p445 = pneg %p103
        $region50: #{fwd.2} parent=31 // pred_check_branch
          %447 = sbr.rel (%p445) target = $region52
        $region51: #{fwd.2} parent=31 // pred_region
          _
        $region52: #{fwd.2} parent=31 // pred_fallthru
          _
      $region32: #{fwd.2} parent=5 // pred_fallthru
        _
      %p448 = scmp.le.s32.totalorder 2, %s12
      // Predicated region
      $region53: #{fwd.2} parent=5 // pred_check
        %p449 = pneg %p448
      $region54: #{fwd.2} parent=5 // pred_check_branch
        %451 = sbr.rel (%p449) target = $region56
      $region55: #{fwd.2} parent=5 // pred_region
        %s452 = ssub.s32 %s12, 2
      $region56: #{fwd.2} parent=5 // pred_fallthru
        _
    $region6: #{fwd.2} parent=1 // loop_footer
      %s16 = sadd.s32 1, %s12
    $region7: #{fwd.2} parent=1 // loop_footer_branch
      %11 = sbr.rel target = $region3
    $region8: #{fwd.2} parent=1 // loop_exit
      _
    %453 = vsyncpa [#allocation4], 1
    %s454 = scalar_lea.sflag [#allocation4], 1
    %455 = vsyncpa %s454, 1

// kernel: fwd.3
$region0: #{fwd.3}
  #allocation0 [shape = 'u32[]', space=smem, size = 0x4, offset = 0x4, fixed_abs, tag = 'smem constant byte address 0x4 - core index']
  #allocation1 [shape = 'u32[144,128]{1,0:T(1,128)}', space=vmem, size = 0x12000, scoped, tag = 'internal scratch']
  %s0 = inlined_call_operand.vmem [shape: f32[32,128], index: 0, kind: input, shape index: {}]
  %s1 = inlined_call_operand.vmem [shape: f32[128,64], index: 1, kind: input, shape index: {}]
  %s2 = inlined_call_operand.vmem [shape: f32[1,64], index: 2, kind: input, shape index: {}]
  %s3 = inlined_call_operand.vmem [shape: f32[64,64], index: 3, kind: input, shape index: {}]
  %s4 = inlined_call_operand.vmem [shape: f32[1,64], index: 4, kind: input, shape index: {}]
  %s5 = inlined_call_operand.vmem [shape: f32[64,64], index: 5, kind: input, shape index: {}]
  %s6 = inlined_call_operand.vmem [shape: f32[1,64], index: 6, kind: input, shape index: {}]
  %s7 = inlined_call_operand.vmem [shape: f32[64,64], index: 7, kind: input, shape index: {}]
  %s8 = inlined_call_operand.vmem [shape: f32[64,64], index: 8, kind: input, shape index: {}]
  %s9 = inlined_call_operand.vmem [shape: s32[24,1], index: 9, kind: input, shape index: {}]
  %s10 = inlined_call_operand.vmem [shape: s32[24,1], index: 10, kind: input, shape index: {}]
  %s11 = inlined_call_operand.vmem [shape: f32[32,64], index: 11, kind: output, shape index: {0}]
  %s12 = inlined_call_operand.vmem [shape: f32[24,1], index: 12, kind: output, shape index: {1}]
  %13 = xla_tuple %s11, %s12
  %s14 = sld [smem:[#allocation0]]
  $region62: #{fwd.3} parent=0
    _
  %s16 = ssub.s32 1, %s14
  %s17 = scalar_select 0, %s16, %s14
  // Predicated region
  $region2: #{fwd.3} parent=0 // pred_check
    _
  $region3: #{fwd.3} parent=0 // pred_check_branch
    %19 = sbr.rel (0) target = $region5
  $region4: #{fwd.3} parent=0 // pred_region
    _
  $region5: #{fwd.3} parent=0 // pred_fallthru
    _
  // Predicated region
  $region6: #{fwd.3} parent=0 // pred_check
    _
  $region7: #{fwd.3} parent=0 // pred_check_branch
    %21 = sbr.rel (0) target = $region9
  $region8: #{fwd.3} parent=0 // pred_region
    _
  $region9: #{fwd.3} parent=0 // pred_fallthru
    _
  // Predicated region
  $region10: #{fwd.3} parent=0 // pred_check
    _
  $region11: #{fwd.3} parent=0 // pred_check_branch
    %23 = sbr.rel (0) target = $region13
  $region12: #{fwd.3} parent=0 // pred_region
    _
  $region13: #{fwd.3} parent=0 // pred_fallthru
    _
  // Predicated region
  $region14: #{fwd.3} parent=0 // pred_check
    _
  $region15: #{fwd.3} parent=0 // pred_check_branch
    %25 = sbr.rel (0) target = $region17
  $region16: #{fwd.3} parent=0 // pred_region
    _
  $region17: #{fwd.3} parent=0 // pred_fallthru
    _
  // Predicated region
  $region18: #{fwd.3} parent=0 // pred_check
    _
  $region19: #{fwd.3} parent=0 // pred_check_branch
    %27 = sbr.rel (0) target = $region21
  $region20: #{fwd.3} parent=0 // pred_region
    _
  $region21: #{fwd.3} parent=0 // pred_fallthru
    _
  // Predicated region
  $region22: #{fwd.3} parent=0 // pred_check
    _
  $region23: #{fwd.3} parent=0 // pred_check_branch
    %29 = sbr.rel (0) target = $region25
  $region24: #{fwd.3} parent=0 // pred_region
    _
  $region25: #{fwd.3} parent=0 // pred_fallthru
    _
  // Predicated region
  $region26: #{fwd.3} parent=0 // pred_check
    _
  $region27: #{fwd.3} parent=0 // pred_check_branch
    %31 = sbr.rel (0) target = $region29
  $region28: #{fwd.3} parent=0 // pred_region
    _
  $region29: #{fwd.3} parent=0 // pred_fallthru
    _
  // Predicated region
  $region30: #{fwd.3} parent=0 // pred_check
    _
  $region31: #{fwd.3} parent=0 // pred_check_branch
    %33 = sbr.rel (0) target = $region33
  $region32: #{fwd.3} parent=0 // pred_region
    _
  $region33: #{fwd.3} parent=0 // pred_fallthru
    _
  // Predicated region
  $region34: #{fwd.3} parent=0 // pred_check
    _
  $region35: #{fwd.3} parent=0 // pred_check_branch
    %35 = sbr.rel (0) target = $region37
  $region36: #{fwd.3} parent=0 // pred_region
    _
  $region37: #{fwd.3} parent=0 // pred_fallthru
    _
  // Predicated region
  $region38: #{fwd.3} parent=0 // pred_check
    _
  $region39: #{fwd.3} parent=0 // pred_check_branch
    %37 = sbr.rel (0) target = $region41
  $region40: #{fwd.3} parent=0 // pred_region
    _
  $region41: #{fwd.3} parent=0 // pred_fallthru
    _
  // Predicated region
  $region42: #{fwd.3} parent=0 // pred_check
    _
  $region43: #{fwd.3} parent=0 // pred_check_branch
    %39 = sbr.rel (0) target = $region45
  $region44: #{fwd.3} parent=0 // pred_region
    _
  $region45: #{fwd.3} parent=0 // pred_fallthru
    _
  %v41 = vld [vmem:[%s0] sm:$0xff]
  %v42 = vld [vmem:[%s0 + $0x8] sm:$0xff]
  %v43 = vld [vmem:[%s0 + $0x10] sm:$0xff]
  %v44 = vld [vmem:[%s0 + $0x18] sm:$0xff]
  %v45 = vpack.c.bf16 %v42, %v41
  %v46 = vpack.c.bf16 %v44, %v43
  %v47 = vld [vmem:[%s1] sm:$0xff]
  %v48 = vld [vmem:[%s1 + $0x8] sm:$0xff]
  %v49 = vld [vmem:[%s1 + $0x10] sm:$0xff]
  %v50 = vld [vmem:[%s1 + $0x18] sm:$0xff]
  %v51 = vld [vmem:[%s1 + $0x20] sm:$0xff]
  %v52 = vld [vmem:[%s1 + $0x28] sm:$0xff]
  %v53 = vld [vmem:[%s1 + $0x30] sm:$0xff]
  %v54 = vld [vmem:[%s1 + $0x38] sm:$0xff]
  %v55 = vld [vmem:[%s1 + $0x40] sm:$0xff]
  %v56 = vld [vmem:[%s1 + $0x48] sm:$0xff]
  %v57 = vld [vmem:[%s1 + $0x50] sm:$0xff]
  %v58 = vld [vmem:[%s1 + $0x58] sm:$0xff]
  %v59 = vld [vmem:[%s1 + $0x60] sm:$0xff]
  %v60 = vld [vmem:[%s1 + $0x68] sm:$0xff]
  %v61 = vld [vmem:[%s1 + $0x70] sm:$0xff]
  %v62 = vld [vmem:[%s1 + $0x78] sm:$0xff]
  %v63 = vpack.c.bf16 %v48, %v47
  %v64 = vpack.c.bf16 %v50, %v49
  %v65 = vpack.c.bf16 %v52, %v51
  %v66 = vpack.c.bf16 %v54, %v53
  %v67 = vpack.c.bf16 %v56, %v55
  %v68 = vpack.c.bf16 %v58, %v57
  %v69 = vpack.c.bf16 %v60, %v59
  %v70 = vpack.c.bf16 %v62, %v61
  %v71 = vld [vmem:[%s2] sm:$0x1]
  %v73 = vlaneseq
  %v74 = vshrl.u32 %v73, 7
  %v75 = vsub.s32 0, %v74
  %v76 = vrot.slane %v71, %v75
  %78 = vmatprep.subr.bf16.mxu0 0
  %79 = vmatpush1.bf16.msra.mxu0 %v70
  %80 = vmatprep.subr.bf16.mxu0 0
  %81 = vmatpush1.bf16.msra.mxu0 %v69
  %82 = vmatprep.subr.bf16.mxu0 0
  %83 = vmatpush1.bf16.msra.mxu0 %v68
  %84 = vmatprep.subr.bf16.mxu0 0
  %85 = vmatpush1.bf16.msra.mxu0 %v67
  %86 = vmatprep.subr.bf16.mxu0 0
  %87 = vmatpush1.bf16.msra.mxu0 %v66
  %88 = vmatprep.subr.bf16.mxu0 0
  %89 = vmatpush1.bf16.msra.mxu0 %v65
  %90 = vmatprep.subr.bf16.mxu0 0
  %91 = vmatpush1.bf16.msra.mxu0 %v64
  %92 = vmatprep.subr.bf16.mxu0 0
  %93 = vmatpush1.bf16.msra.mxu0 %v63
  %94 = vmatprep.subr.bf16.mxu0 0
  %95 = vmatpush2.bf16.msra.mxu0 0
  %96 = vmatprep.subr.bf16.mxu0 0
  %97 = vmatpush2.bf16.msra.mxu0 0
  %98 = vmatprep.subr.bf16.mxu0 0
  %99 = vmatpush2.bf16.msra.mxu0 0
  %100 = vmatprep.subr.bf16.mxu0 0
  %101 = vmatpush2.bf16.msra.mxu0 0
  %102 = vmatprep.subr.bf16.mxu0 0
  %103 = vmatpush2.bf16.msra.mxu0 0
  %104 = vmatprep.subr.bf16.mxu0 0
  %105 = vmatpush2.bf16.msra.mxu0 0
  %106 = vmatprep.subr.bf16.mxu0 0
  %107 = vmatpush2.bf16.msra.mxu0 0
  %108 = vmatprep.subr.bf16.mxu0 0
  %109 = vmatpush2.bf16.msra.mxu0 0
  %110 = vmatprep.mubr.bf16.mxu0 0
  %111 = vmatmul.mubr.bf16.gmra.mxu0 %v45
  %v112 = vpop.f32.mrf.mxu0
  %v113 = vadd.f32 %v76, %v112
  %v114 = vpop.f32.mrf.mxu0
  %v115 = vpop.f32.mrf.mxu0
  %v116 = vadd.f32 %v76, %v115
  %v117 = vpop.f32.mrf.mxu0
  %118 = vmatprep.mubr.bf16.mxu0 0
  %119 = vmatmul.mubr.bf16.gmra.mxu0 %v46
  %v120 = vpop.f32.mrf.mxu0
  %v121 = vadd.f32 %v76, %v120
  %v122 = vpop.f32.mrf.mxu0
  %v123 = vpop.f32.mrf.mxu0
  %v124 = vadd.f32 %v76, %v123
  %v125 = vpop.f32.mrf.mxu0
  %126 = vdwg.mxu0
  %vm127 = vcmp.gt.f32.partialorder %v113, 0.0
  %vm128 = vcmp.gt.f32.partialorder %v116, 0.0
  %vm129 = vcmp.gt.f32.partialorder %v121, 0.0
  %vm130 = vcmp.gt.f32.partialorder %v124, 0.0
  %v131 = vmul.f32 %v113, 0.01
  %v132 = vmul.f32 %v116, 0.01
  %v133 = vmul.f32 %v121, 0.01
  %v134 = vmul.f32 %v124, 0.01
  %v135 = vsel %vm127, %v113, %v131
  %v136 = vsel %vm128, %v116, %v132
  %v137 = vsel %vm129, %v121, %v133
  %v138 = vsel %vm130, %v124, %v134
  %v139 = vld [vmem:[%s3] sm:$0xff]
  %v140 = vld [vmem:[%s3 + $0x8] sm:$0xff]
  %v141 = vld [vmem:[%s3 + $0x10] sm:$0xff]
  %v142 = vld [vmem:[%s3 + $0x18] sm:$0xff]
  %v143 = vld [vmem:[%s3 + $0x20] sm:$0xff]
  %v144 = vld [vmem:[%s3 + $0x28] sm:$0xff]
  %v145 = vld [vmem:[%s3 + $0x30] sm:$0xff]
  %v146 = vld [vmem:[%s3 + $0x38] sm:$0xff]
  %v147 = vpack.c.bf16 %v140, %v139
  %v148 = vpack.c.bf16 %v142, %v141
  %v149 = vpack.c.bf16 %v144, %v143
  %v150 = vpack.c.bf16 %v146, %v145
  %v151 = vld [vmem:[%s4] sm:$0x1]
  %v152 = vpack.c.bf16 %v136, %v135
  %v153 = vpack.c.bf16 %v138, %v137
  %v155 = vlaneseq
  %v156 = vshrl.u32 %v155, 7
  %v157 = vsub.s32 0, %v156
  %v158 = vrot.slane %v151, %v157
  %vm160 = vcmask 523264
  %v162 = vsel %vm160, %v152, 0
  %v165 = vsel %vm160, %v153, 0
  %167 = vmatprep.subr.bf16.mxu0 0
  %168 = vmatpush1.bf16.msra.mxu0 0
  %169 = vmatprep.subr.bf16.mxu0 0
  %170 = vmatpush1.bf16.msra.mxu0 0
  %171 = vmatprep.subr.bf16.mxu0 0
  %172 = vmatpush1.bf16.msra.mxu0 0
  %173 = vmatprep.subr.bf16.mxu0 0
  %174 = vmatpush1.bf16.msra.mxu0 0
  %175 = vmatprep.subr.bf16.mxu0 0
  %176 = vmatpush1.bf16.msra.mxu0 %v150
  %177 = vmatprep.subr.bf16.mxu0 0
  %178 = vmatpush1.bf16.msra.mxu0 %v149
  %179 = vmatprep.subr.bf16.mxu0 0
  %180 = vmatpush1.bf16.msra.mxu0 %v148
  %181 = vmatprep.subr.bf16.mxu0 0
  %182 = vmatpush1.bf16.msra.mxu0 %v147
  %183 = vmatprep.subr.bf16.mxu0 0
  %184 = vmatpush2.bf16.msra.mxu0 0
  %185 = vmatprep.subr.bf16.mxu0 0
  %186 = vmatpush2.bf16.msra.mxu0 0
  %187 = vmatprep.subr.bf16.mxu0 0
  %188 = vmatpush2.bf16.msra.mxu0 0
  %189 = vmatprep.subr.bf16.mxu0 0
  %190 = vmatpush2.bf16.msra.mxu0 0
  %191 = vmatprep.subr.bf16.mxu0 0
  %192 = vmatpush2.bf16.msra.mxu0 0
  %193 = vmatprep.subr.bf16.mxu0 0
  %194 = vmatpush2.bf16.msra.mxu0 0
  %195 = vmatprep.subr.bf16.mxu0 0
  %196 = vmatpush2.bf16.msra.mxu0 0
  %197 = vmatprep.subr.bf16.mxu0 0
  %198 = vmatpush2.bf16.msra.mxu0 0
  %199 = vmatprep.mubr.bf16.mxu0 0
  %200 = vmatmul.mubr.bf16.gmra.mxu0 %v162
  %v201 = vpop.f32.mrf.mxu0
  %v202 = vadd.f32 %v158, %v201
  %v203 = vpop.f32.mrf.mxu0
  %v204 = vpop.f32.mrf.mxu0
  %v205 = vadd.f32 %v158, %v204
  %v206 = vpop.f32.mrf.mxu0
  %207 = vmatprep.mubr.bf16.mxu0 0
  %208 = vmatmul.mubr.bf16.gmra.mxu0 %v165
  %v209 = vpop.f32.mrf.mxu0
  %v210 = vadd.f32 %v158, %v209
  %v211 = vpop.f32.mrf.mxu0
  %v212 = vpop.f32.mrf.mxu0
  %v213 = vadd.f32 %v158, %v212
  %v214 = vpop.f32.mrf.mxu0
  %215 = vdwg.mxu0
  %vm216 = vcmp.gt.f32.partialorder %v202, 0.0
  %vm217 = vcmp.gt.f32.partialorder %v205, 0.0
  %vm218 = vcmp.gt.f32.partialorder %v210, 0.0
  %vm219 = vcmp.gt.f32.partialorder %v213, 0.0
  %v220 = vmul.f32 %v202, 0.01
  %v221 = vmul.f32 %v205, 0.01
  %v222 = vmul.f32 %v210, 0.01
  %v223 = vmul.f32 %v213, 0.01
  %v224 = vsel %vm216, %v202, %v220
  %v225 = vsel %vm217, %v205, %v221
  %v226 = vsel %vm218, %v210, %v222
  %v227 = vsel %vm219, %v213, %v223
  %v228 = vld [vmem:[%s5] sm:$0xff]
  %v229 = vld [vmem:[%s5 + $0x8] sm:$0xff]
  %v230 = vld [vmem:[%s5 + $0x10] sm:$0xff]
  %v231 = vld [vmem:[%s5 + $0x18] sm:$0xff]
  %v232 = vld [vmem:[%s5 + $0x20] sm:$0xff]
  %v233 = vld [vmem:[%s5 + $0x28] sm:$0xff]
  %v234 = vld [vmem:[%s5 + $0x30] sm:$0xff]
  %v235 = vld [vmem:[%s5 + $0x38] sm:$0xff]
  %v236 = vpack.c.bf16 %v229, %v228
  %v237 = vpack.c.bf16 %v231, %v230
  %v238 = vpack.c.bf16 %v233, %v232
  %v239 = vpack.c.bf16 %v235, %v234
  %v240 = vld [vmem:[%s6] sm:$0x1]
  %v241 = vpack.c.bf16 %v225, %v224
  %v242 = vpack.c.bf16 %v227, %v226
  %v244 = vlaneseq
  %v245 = vshrl.u32 %v244, 7
  %v246 = vsub.s32 0, %v245
  %v247 = vrot.slane %v240, %v246
  %v250 = vsel %vm160, %v241, 0
  %v253 = vsel %vm160, %v242, 0
  %255 = vmatprep.subr.bf16.mxu0 0
  %256 = vmatpush1.bf16.msra.mxu0 0
  %257 = vmatprep.subr.bf16.mxu0 0
  %258 = vmatpush1.bf16.msra.mxu0 0
  %259 = vmatprep.subr.bf16.mxu0 0
  %260 = vmatpush1.bf16.msra.mxu0 0
  %261 = vmatprep.subr.bf16.mxu0 0
  %262 = vmatpush1.bf16.msra.mxu0 0
  %263 = vmatprep.subr.bf16.mxu0 0
  %264 = vmatpush1.bf16.msra.mxu0 %v239
  %265 = vmatprep.subr.bf16.mxu0 0
  %266 = vmatpush1.bf16.msra.mxu0 %v238
  %267 = vmatprep.subr.bf16.mxu0 0
  %268 = vmatpush1.bf16.msra.mxu0 %v237
  %269 = vmatprep.subr.bf16.mxu0 0
  %270 = vmatpush1.bf16.msra.mxu0 %v236
  %271 = vmatprep.subr.bf16.mxu0 0
  %272 = vmatpush2.bf16.msra.mxu0 0
  %273 = vmatprep.subr.bf16.mxu0 0
  %274 = vmatpush2.bf16.msra.mxu0 0
  %275 = vmatprep.subr.bf16.mxu0 0
  %276 = vmatpush2.bf16.msra.mxu0 0
  %277 = vmatprep.subr.bf16.mxu0 0
  %278 = vmatpush2.bf16.msra.mxu0 0
  %279 = vmatprep.subr.bf16.mxu0 0
  %280 = vmatpush2.bf16.msra.mxu0 0
  %281 = vmatprep.subr.bf16.mxu0 0
  %282 = vmatpush2.bf16.msra.mxu0 0
  %283 = vmatprep.subr.bf16.mxu0 0
  %284 = vmatpush2.bf16.msra.mxu0 0
  %285 = vmatprep.subr.bf16.mxu0 0
  %286 = vmatpush2.bf16.msra.mxu0 0
  %287 = vmatprep.mubr.bf16.mxu0 0
  %288 = vmatmul.mubr.bf16.gmra.mxu0 %v250
  %v289 = vpop.f32.mrf.mxu0
  %v290 = vadd.f32 %v247, %v289
  %v291 = vpop.f32.mrf.mxu0
  %v292 = vpop.f32.mrf.mxu0
  %v293 = vadd.f32 %v247, %v292
  %v294 = vpop.f32.mrf.mxu0
  %295 = vmatprep.mubr.bf16.mxu0 0
  %296 = vmatmul.mubr.bf16.gmra.mxu0 %v253
  %v297 = vpop.f32.mrf.mxu0
  %v298 = vadd.f32 %v247, %v297
  %v299 = vpop.f32.mrf.mxu0
  %v300 = vpop.f32.mrf.mxu0
  %v301 = vadd.f32 %v247, %v300
  %v302 = vpop.f32.mrf.mxu0
  %303 = vdwg.mxu0
  %304 = vst.msk [vmem:[%s11] sm:$0xff] %vm160, %v290
  %305 = vst.msk [vmem:[%s11 + $0x8] sm:$0xff] %vm160, %v293
  %306 = vst.msk [vmem:[%s11 + $0x10] sm:$0xff] %vm160, %v298
  %307 = vst.msk [vmem:[%s11 + $0x18] sm:$0xff] %vm160, %v301
  %v308 = vld [vmem:[%s7] sm:$0xff]
  %v309 = vld [vmem:[%s7 + $0x8] sm:$0xff]
  %v310 = vld [vmem:[%s7 + $0x10] sm:$0xff]
  %v311 = vld [vmem:[%s7 + $0x18] sm:$0xff]
  %v312 = vld [vmem:[%s7 + $0x20] sm:$0xff]
  %v313 = vld [vmem:[%s7 + $0x28] sm:$0xff]
  %v314 = vld [vmem:[%s7 + $0x30] sm:$0xff]
  %v315 = vld [vmem:[%s7 + $0x38] sm:$0xff]
  %v316 = vpack.c.bf16 %v309, %v308
  %v317 = vpack.c.bf16 %v311, %v310
  %v318 = vpack.c.bf16 %v313, %v312
  %v319 = vpack.c.bf16 %v315, %v314
  %320 = vmatprep.subr.bf16.mxu0 0
  %321 = vmatpush1.bf16.msra.mxu0 0
  %322 = vmatprep.subr.bf16.mxu0 0
  %323 = vmatpush1.bf16.msra.mxu0 0
  %324 = vmatprep.subr.bf16.mxu0 0
  %325 = vmatpush1.bf16.msra.mxu0 0
  %326 = vmatprep.subr.bf16.mxu0 0
  %327 = vmatpush1.bf16.msra.mxu0 0
  %328 = vmatprep.subr.bf16.mxu0 0
  %329 = vmatpush1.bf16.msra.mxu0 %v319
  %330 = vmatprep.subr.bf16.mxu0 0
  %331 = vmatpush1.bf16.msra.mxu0 %v318
  %332 = vmatprep.subr.bf16.mxu0 0
  %333 = vmatpush1.bf16.msra.mxu0 %v317
  %334 = vmatprep.subr.bf16.mxu0 0
  %335 = vmatpush1.bf16.msra.mxu0 %v316
  %336 = vmatprep.subr.bf16.mxu0 0
  %337 = vmatpush2.bf16.msra.mxu0 0
  %338 = vmatprep.subr.bf16.mxu0 0
  %339 = vmatpush2.bf16.msra.mxu0 0
  %340 = vmatprep.subr.bf16.mxu0 0
  %341 = vmatpush2.bf16.msra.mxu0 0
  %342 = vmatprep.subr.bf16.mxu0 0
  %343 = vmatpush2.bf16.msra.mxu0 0
  %344 = vmatprep.subr.bf16.mxu0 0
  %345 = vmatpush2.bf16.msra.mxu0 0
  %346 = vmatprep.subr.bf16.mxu0 0
  %347 = vmatpush2.bf16.msra.mxu0 0
  %348 = vmatprep.subr.bf16.mxu0 0
  %349 = vmatpush2.bf16.msra.mxu0 0
  %350 = vmatprep.subr.bf16.mxu0 0
  %351 = vmatpush2.bf16.msra.mxu0 0
  %352 = vmatprep.mubr.bf16.mxu0 0
  %353 = vmatmul.mubr.bf16.gmra.mxu0 %v162
  %v354 = vpop.f32.mrf.mxu0
  %v355 = vadd.f32 0.0, %v354
  %v356 = vpop.f32.mrf.mxu0
  %v357 = vpop.f32.mrf.mxu0
  %v358 = vadd.f32 0.0, %v357
  %v359 = vpop.f32.mrf.mxu0
  %360 = vdwg.mxu0
  %v361 = vld [vmem:[%s8] sm:$0xff]
  %v362 = vld [vmem:[%s8 + $0x8] sm:$0xff]
  %v363 = vld [vmem:[%s8 + $0x10] sm:$0xff]
  %v364 = vld [vmem:[%s8 + $0x18] sm:$0xff]
  %v365 = vld [vmem:[%s8 + $0x20] sm:$0xff]
  %v366 = vld [vmem:[%s8 + $0x28] sm:$0xff]
  %v367 = vld [vmem:[%s8 + $0x30] sm:$0xff]
  %v368 = vld [vmem:[%s8 + $0x38] sm:$0xff]
  %v369 = vpack.c.bf16 %v362, %v361
  %v370 = vpack.c.bf16 %v364, %v363
  %v371 = vpack.c.bf16 %v366, %v365
  %v372 = vpack.c.bf16 %v368, %v367
  %373 = vmatprep.subr.bf16.mxu0 0
  %374 = vmatpush1.bf16.msra.mxu0 0
  %375 = vmatprep.subr.bf16.mxu0 0
  %376 = vmatpush1.bf16.msra.mxu0 0
  %377 = vmatprep.subr.bf16.mxu0 0
  %378 = vmatpush1.bf16.msra.mxu0 0
  %379 = vmatprep.subr.bf16.mxu0 0
  %380 = vmatpush1.bf16.msra.mxu0 0
  %381 = vmatprep.subr.bf16.mxu0 0
  %382 = vmatpush1.bf16.msra.mxu0 %v372
  %383 = vmatprep.subr.bf16.mxu0 0
  %384 = vmatpush1.bf16.msra.mxu0 %v371
  %385 = vmatprep.subr.bf16.mxu0 0
  %386 = vmatpush1.bf16.msra.mxu0 %v370
  %387 = vmatprep.subr.bf16.mxu0 0
  %388 = vmatpush1.bf16.msra.mxu0 %v369
  %389 = vmatprep.subr.bf16.mxu0 0
  %390 = vmatpush2.bf16.msra.mxu0 0
  %391 = vmatprep.subr.bf16.mxu0 0
  %392 = vmatpush2.bf16.msra.mxu0 0
  %393 = vmatprep.subr.bf16.mxu0 0
  %394 = vmatpush2.bf16.msra.mxu0 0
  %395 = vmatprep.subr.bf16.mxu0 0
  %396 = vmatpush2.bf16.msra.mxu0 0
  %397 = vmatprep.subr.bf16.mxu0 0
  %398 = vmatpush2.bf16.msra.mxu0 0
  %399 = vmatprep.subr.bf16.mxu0 0
  %400 = vmatpush2.bf16.msra.mxu0 0
  %401 = vmatprep.subr.bf16.mxu0 0
  %402 = vmatpush2.bf16.msra.mxu0 0
  %403 = vmatprep.subr.bf16.mxu0 0
  %404 = vmatpush2.bf16.msra.mxu0 0
  %405 = vmatprep.mubr.bf16.mxu0 0
  %406 = vmatmul.mubr.bf16.gmra.mxu0 %v165
  %v407 = vpop.f32.mrf.mxu0
  %v408 = vadd.f32 0.0, %v407
  %v409 = vpop.f32.mrf.mxu0
  %v410 = vpop.f32.mrf.mxu0
  %v411 = vadd.f32 0.0, %v410
  %v412 = vpop.f32.mrf.mxu0
  %413 = vdwg.mxu0
  %v414 = vld [vmem:[%s9] sm:$0xff]
  %v415 = vld [vmem:[%s9 + $0x8] sm:$0xff]
  %v416 = vld [vmem:[%s9 + $0x10] sm:$0xff]
  %v417 = vlaneseq
  %v418 = vand.u32 %v417, 127
  %419 = vset.pattern.permute.xlu0 0
  %420 = vperm.xlu0 %419, %v414
  %v421 = vpop.permute.xlu0 %420
  %422 = vset.pattern.permute.xlu0 0
  %423 = vperm.xlu0 %422, %v415
  %v424 = vpop.permute.xlu0 %423
  %425 = vset.pattern.permute.xlu0 0
  %426 = vperm.xlu0 %425, %v416
  %v427 = vpop.permute.xlu0 %426
  %vm428 = vcmp.eq.s32.totalorder %v421, %v418
  %vm429 = vcmp.eq.s32.totalorder %v424, %v418
  %vm430 = vcmp.eq.s32.totalorder %v427, %v418
  %v431 = vsel %vm428, 1, 0
  %v432 = vsel %vm429, 1, 0
  %v433 = vsel %vm430, 1, 0
  %v434 = vcvt.s32.f32 %v431
  %v435 = vcvt.s32.f32 %v432
  %v436 = vcvt.s32.f32 %v433
  %v437 = vld [vmem:[%s10] sm:$0xff]
  %v438 = vld [vmem:[%s10 + $0x8] sm:$0xff]
  %v439 = vld [vmem:[%s10 + $0x10] sm:$0xff]
  %440 = vset.pattern.permute.xlu0 0
  %441 = vperm.xlu0 %440, %v437
  %v442 = vpop.permute.xlu0 %441
  %443 = vset.pattern.permute.xlu0 0
  %444 = vperm.xlu0 %443, %v438
  %v445 = vpop.permute.xlu0 %444
  %446 = vset.pattern.permute.xlu0 0
  %447 = vperm.xlu0 %446, %v439
  %v448 = vpop.permute.xlu0 %447
  %vm449 = vcmp.eq.s32.totalorder %v442, %v418
  %vm450 = vcmp.eq.s32.totalorder %v445, %v418
  %vm451 = vcmp.eq.s32.totalorder %v448, %v418
  %v452 = vsel %vm449, 1, 0
  %v453 = vsel %vm450, 1, 0
  %v454 = vsel %vm451, 1, 0
  %v455 = vcvt.s32.f32 %v452
  %v456 = vcvt.s32.f32 %v453
  %v457 = vcvt.s32.f32 %v454
  %vm458 = vcmask 130048
  %v460 = vsel %vm458, %v434, 0
  %v463 = vsel %vm458, %v435, 0
  %v466 = vsel %vm458, %v436, 0
  %468 = vmatprep.subr.mxu0 0.0
  %469 = vmatpush1.msra.mxu0 0.0
  %470 = vmatprep.subr.mxu0 0.0
  %471 = vmatpush1.msra.mxu0 0.0
  %472 = vmatprep.subr.mxu0 0.0
  %473 = vmatpush1.msra.mxu0 0.0
  %474 = vmatprep.subr.mxu0 0.0
  %475 = vmatpush1.msra.mxu0 0.0
  %476 = vmatprep.subr.mxu0 0.0
  %477 = vmatpush1.msra.mxu0 0.0
  %478 = vmatprep.subr.mxu0 0.0
  %479 = vmatpush1.msra.mxu0 0.0
  %480 = vmatprep.subr.mxu0 0.0
  %481 = vmatpush1.msra.mxu0 0.0
  %482 = vmatprep.subr.mxu0 0.0
  %483 = vmatpush1.msra.mxu0 0.0
  %484 = vmatprep.subr.mxu0 0.0
  %485 = vmatpush1.msra.mxu0 0.0
  %486 = vmatprep.subr.mxu0 0.0
  %487 = vmatpush1.msra.mxu0 0.0
  %488 = vmatprep.subr.mxu0 0.0
  %489 = vmatpush1.msra.mxu0 0.0
  %490 = vmatprep.subr.mxu0 0.0
  %491 = vmatpush1.msra.mxu0 0.0
  %492 = vmatprep.subr.mxu0 0.0
  %493 = vmatpush1.msra.mxu0 0.0
  %494 = vmatprep.subr.mxu0 0.0
  %495 = vmatpush1.msra.mxu0 0.0
  %496 = vmatprep.subr.mxu0 0.0
  %497 = vmatpush1.msra.mxu0 %v358
  %498 = vmatprep.subr.mxu0 0.0
  %499 = vmatpush1.msra.mxu0 %v355
  %500 = vmatprep.subr.mxu0 0.0
  %501 = vmatpush2.msra.mxu0 0.0
  %502 = vmatprep.subr.mxu0 0.0
  %503 = vmatpush2.msra.mxu0 0.0
  %504 = vmatprep.subr.mxu0 0.0
  %505 = vmatpush2.msra.mxu0 0.0
  %506 = vmatprep.subr.mxu0 0.0
  %507 = vmatpush2.msra.mxu0 0.0
  %508 = vmatprep.subr.mxu0 0.0
  %509 = vmatpush2.msra.mxu0 0.0
  %510 = vmatprep.subr.mxu0 0.0
  %511 = vmatpush2.msra.mxu0 0.0
  %512 = vmatprep.subr.mxu0 0.0
  %513 = vmatpush2.msra.mxu0 0.0
  %514 = vmatprep.subr.mxu0 0.0
  %515 = vmatpush2.msra.mxu0 0.0
  %516 = vmatprep.subr.mxu0 0.0
  %517 = vmatpush2.msra.mxu0 0.0
  %518 = vmatprep.subr.mxu0 0.0
  %519 = vmatpush2.msra.mxu0 0.0
  %520 = vmatprep.subr.mxu0 0.0
  %521 = vmatpush2.msra.mxu0 0.0
  %522 = vmatprep.subr.mxu0 0.0
  %523 = vmatpush2.msra.mxu0 0.0
  %524 = vmatprep.subr.mxu0 0.0
  %525 = vmatpush2.msra.mxu0 0.0
  %526 = vmatprep.subr.mxu0 0.0
  %527 = vmatpush2.msra.mxu0 0.0
  %528 = vmatprep.subr.mxu0 0.0
  %529 = vmatpush2.msra.mxu0 0.0
  %530 = vmatprep.subr.mxu0 0.0
  %531 = vmatpush2.msra.mxu0 0.0
  %532 = vmatprep.mubr.f32.mxu0 0.0
  %533 = vmatmul.mubr.f32.gmra.mxu0 %v460
  %v534 = vpop.f32.mrf.mxu0
  %v535 = vadd.f32 0.0, %v534
  %v536 = vpop.f32.mrf.mxu0
  %537 = vmatprep.mubr.f32.mxu0 0.0
  %538 = vmatmul.mubr.f32.gmra.mxu0 %v463
  %v539 = vpop.f32.mrf.mxu0
  %v540 = vadd.f32 0.0, %v539
  %v541 = vpop.f32.mrf.mxu0
  %542 = vmatprep.mubr.f32.mxu0 0.0
  %543 = vmatmul.mubr.f32.gmra.mxu0 %v466
  %v544 = vpop.f32.mrf.mxu0
  %v545 = vadd.f32 0.0, %v544
  %v546 = vpop.f32.mrf.mxu0
  %547 = vdwg.mxu0
  %v549 = vsel %vm458, %v455, 0
  %v552 = vsel %vm458, %v456, 0
  %v555 = vsel %vm458, %v457, 0
  %557 = vmatprep.subr.mxu0 0.0
  %558 = vmatpush1.msra.mxu0 0.0
  %559 = vmatprep.subr.mxu0 0.0
  %560 = vmatpush1.msra.mxu0 0.0
  %561 = vmatprep.subr.mxu0 0.0
  %562 = vmatpush1.msra.mxu0 0.0
  %563 = vmatprep.subr.mxu0 0.0
  %564 = vmatpush1.msra.mxu0 0.0
  %565 = vmatprep.subr.mxu0 0.0
  %566 = vmatpush1.msra.mxu0 0.0
  %567 = vmatprep.subr.mxu0 0.0
  %568 = vmatpush1.msra.mxu0 0.0
  %569 = vmatprep.subr.mxu0 0.0
  %570 = vmatpush1.msra.mxu0 0.0
  %571 = vmatprep.subr.mxu0 0.0
  %572 = vmatpush1.msra.mxu0 0.0
  %573 = vmatprep.subr.mxu0 0.0
  %574 = vmatpush1.msra.mxu0 0.0
  %575 = vmatprep.subr.mxu0 0.0
  %576 = vmatpush1.msra.mxu0 0.0
  %577 = vmatprep.subr.mxu0 0.0
  %578 = vmatpush1.msra.mxu0 0.0
  %579 = vmatprep.subr.mxu0 0.0
  %580 = vmatpush1.msra.mxu0 0.0
  %581 = vmatprep.subr.mxu0 0.0
  %582 = vmatpush1.msra.mxu0 0.0
  %583 = vmatprep.subr.mxu0 0.0
  %584 = vmatpush1.msra.mxu0 0.0
  %585 = vmatprep.subr.mxu0 0.0
  %586 = vmatpush1.msra.mxu0 %v411
  %587 = vmatprep.subr.mxu0 0.0
  %588 = vmatpush1.msra.mxu0 %v408
  %589 = vmatprep.subr.mxu0 0.0
  %590 = vmatpush2.msra.mxu0 0.0
  %591 = vmatprep.subr.mxu0 0.0
  %592 = vmatpush2.msra.mxu0 0.0
  %593 = vmatprep.subr.mxu0 0.0
  %594 = vmatpush2.msra.mxu0 0.0
  %595 = vmatprep.subr.mxu0 0.0
  %596 = vmatpush2.msra.mxu0 0.0
  %597 = vmatprep.subr.mxu0 0.0
  %598 = vmatpush2.msra.mxu0 0.0
  %599 = vmatprep.subr.mxu0 0.0
  %600 = vmatpush2.msra.mxu0 0.0
  %601 = vmatprep.subr.mxu0 0.0
  %602 = vmatpush2.msra.mxu0 0.0
  %603 = vmatprep.subr.mxu0 0.0
  %604 = vmatpush2.msra.mxu0 0.0
  %605 = vmatprep.subr.mxu0 0.0
  %606 = vmatpush2.msra.mxu0 0.0
  %607 = vmatprep.subr.mxu0 0.0
  %608 = vmatpush2.msra.mxu0 0.0
  %609 = vmatprep.subr.mxu0 0.0
  %610 = vmatpush2.msra.mxu0 0.0
  %611 = vmatprep.subr.mxu0 0.0
  %612 = vmatpush2.msra.mxu0 0.0
  %613 = vmatprep.subr.mxu0 0.0
  %614 = vmatpush2.msra.mxu0 0.0
  %615 = vmatprep.subr.mxu0 0.0
  %616 = vmatpush2.msra.mxu0 0.0
  %617 = vmatprep.subr.mxu0 0.0
  %618 = vmatpush2.msra.mxu0 0.0
  %619 = vmatprep.subr.mxu0 0.0
  %620 = vmatpush2.msra.mxu0 0.0
  %621 = vmatprep.mubr.f32.mxu0 0.0
  %622 = vmatmul.mubr.f32.gmra.mxu0 %v549
  %v623 = vpop.f32.mrf.mxu0
  %v624 = vadd.f32 0.0, %v623
  %v625 = vpop.f32.mrf.mxu0
  %626 = vmatprep.mubr.f32.mxu0 0.0
  %627 = vmatmul.mubr.f32.gmra.mxu0 %v552
  %v628 = vpop.f32.mrf.mxu0
  %v629 = vadd.f32 0.0, %v628
  %v630 = vpop.f32.mrf.mxu0
  %631 = vmatprep.mubr.f32.mxu0 0.0
  %632 = vmatmul.mubr.f32.gmra.mxu0 %v555
  %v633 = vpop.f32.mrf.mxu0
  %v634 = vadd.f32 0.0, %v633
  %v635 = vpop.f32.mrf.mxu0
  %636 = vdwg.mxu0
  %v637 = vmul.f32 %v535, %v624
  %v638 = vmul.f32 %v540, %v629
  %v639 = vmul.f32 %v545, %v634
  %v640 = vsel %vm160, %v637, 0.0
  %641 = vadd.xlane.f32.xlu0 %v640
  %v642 = vpop.xlane.xlu0 %641
  %v643 = vsel %vm160, %v638, 0.0
  %644 = vadd.xlane.f32.xlu0 %v643
  %v645 = vpop.xlane.xlu0 %644
  %v646 = vsel %vm160, %v639, 0.0
  %647 = vadd.xlane.f32.xlu0 %v646
  %v648 = vpop.xlane.xlu0 %647
  %vm649 = vcmask 7168
  %650 = vst.msk [vmem:[%s12] sm:$0xff] %vm649, %v642
  %651 = vst.msk [vmem:[%s12 + $0x8] sm:$0xff] %vm649, %v645
  %652 = vst.msk [vmem:[%s12 + $0x10] sm:$0xff] %vm649, %v648
  // Predicated region
  $region46: #{fwd.3} parent=0 // pred_check
    _
  $region47: #{fwd.3} parent=0 // pred_check_branch
    %654 = sbr.rel (0) target = $region49
  $region48: #{fwd.3} parent=0 // pred_region
    _
  $region49: #{fwd.3} parent=0 // pred_fallthru
    _
  // Predicated region
  $region50: #{fwd.3} parent=0 // pred_check
    _
  $region51: #{fwd.3} parent=0 // pred_check_branch
    %656 = sbr.rel (0) target = $region53
  $region52: #{fwd.3} parent=0 // pred_region
    _
  $region53: #{fwd.3} parent=0 // pred_fallthru
    _
  // Predicated region
  $region54: #{fwd.3} parent=0 // pred_check
    _
  $region55: #{fwd.3} parent=0 // pred_check_branch
    %658 = sbr.rel (0) target = $region57
  $region56: #{fwd.3} parent=0 // pred_region
    _
  $region57: #{fwd.3} parent=0 // pred_fallthru
    _
  // Predicated region
  $region58: #{fwd.3} parent=0 // pred_check
    _
  $region59: #{fwd.3} parent=0 // pred_check_branch
    %660 = sbr.rel (0) target = $region61
  $region60: #{fwd.3} parent=0 // pred_region
    _
  $region61: #{fwd.3} parent=0 // pred_fallthru
    _

</llo_original>
